<compile_context>
chip_gen: v7x
topology: tpu7x:2x2x1
jax: 0.10.0
libtpu: 0.0.40
codegen_flags: <defaults>
</compile_context>

<pallas_src>
import functools
import math

import jax
import jax.numpy as jnp
from jax import lax
from jax.experimental import pallas as pl
from jax.experimental.pallas import tpu as pltpu


# ----------------------------- helpers -------------------------------------

def _choose_tile(dim, target, align):
    """Largest aligned tile <= target that evenly divides dim, else full dim."""
    if dim <= target:
        return dim
    t = (target // align) * align
    while t >= align:
        if dim % t == 0:
            return t
        t -= align
    return dim


# ----------------------------- Pallas kernels ------------------------------

def _linear_kernel(x_ref, w_ref, b_ref, o_ref, acc_ref):
    # x: (tm, tk) f32/bf16, w: (tk, tn) bf16 pre-transposed, b: (1, tn) f32,
    # acc: (tm, tn) f32
    k = pl.program_id(2)

    @pl.when(k == 0)
    def _():
        acc_ref[...] = jnp.zeros_like(acc_ref)

    acc_ref[...] += jnp.dot(x_ref[...].astype(jnp.bfloat16), w_ref[...],
                            preferred_element_type=jnp.float32)

    @pl.when(k == pl.num_programs(2) - 1)
    def _():
        o_ref[...] = (acc_ref[...] + b_ref[...]).astype(o_ref.dtype)


def _fused_attn_kernel(x_ref, kv_ref, wq_ref, bq_ref, wo_ref, bo_ref, o_ref,
                       q_s, m_s, l_s, acc_s, *, num_heads, head_dim, qdim):
    # x_ref : (1, tq, qdim)  f32    -- input activations (q proj done here)
    # kv_ref: (1, tkv, 2qd)  bf16   -- [:, :qdim] = k, [:, qdim:] = v (per head)
    # wq/wo : (qdim, qdim)   bf16   -- pre-transposed; wq pre-scaled by 1/sqrt(d)
    # bq/bo : (1, qdim)      f32
    # o_ref : (1, tq, qdim)  f32    -- lane-dense output block
    # scratch: q_s (tq,qdim) bf16, m/l (H,tq,1) f32, acc (tq,qdim) f32
    ki = pl.program_id(2)

    @pl.when(ki == 0)
    def _():
        xq = jnp.dot(x_ref[0].astype(jnp.bfloat16), wq_ref[...],
                     preferred_element_type=jnp.float32) + bq_ref[...]
        q_s[...] = xq.astype(q_s.dtype)
        m_s[...] = jnp.full_like(m_s, -jnp.inf)
        l_s[...] = jnp.zeros_like(l_s)
        acc_s[...] = jnp.zeros_like(acc_s)

    kv = kv_ref[0]                                        # (tkv, 2*qdim) bf16
    for h in range(num_heads):                            # static unrolled loop
        lo = h * head_dim
        q_h = q_s[:, lo:lo + head_dim]                    # (tq, D)  bf16
        k_h = kv[:, lo:lo + head_dim]                     # (tkv, D) bf16
        v_h = kv[:, qdim + lo:qdim + lo + head_dim]       # (tkv, D) bf16
        # contract last dims directly (no in-VMEM transpose of k)
        s = lax.dot_general(q_h, k_h, (((1,), (1,)), ((), ())),
                            preferred_element_type=jnp.float32)   # (tq, tkv)
        m_prev = m_s[h]                                   # (tq, 1)
        m_new = jnp.maximum(m_prev, jnp.max(s, axis=-1, keepdims=True))
        alpha = jnp.exp(m_prev - m_new)
        p = jnp.exp(s - m_new)
        l_s[h] = alpha * l_s[h] + jnp.sum(p, axis=-1, keepdims=True)
        # per-head write straight into the accumulator slice (no concatenate)
        acc_s[:, lo:lo + head_dim] = (
            alpha * acc_s[:, lo:lo + head_dim]
            + jnp.dot(p.astype(jnp.bfloat16), v_h,
                      preferred_element_type=jnp.float32))
        m_s[h] = m_new

    @pl.when(ki == pl.num_programs(2) - 1)
    def _():
        for h in range(num_heads):
            lo = h * head_dim
            denom = l_s[h]
            r = pl.reciprocal(denom, approx=True)   # EUP slot (nearly free)
            r = r * (2.0 - denom * r)               # one NR step -> ~f32 accuracy
            acc_s[:, lo:lo + head_dim] = acc_s[:, lo:lo + head_dim] * r
        ctx = acc_s[...].astype(jnp.bfloat16)       # (tq, qdim)
        out = jnp.dot(ctx, wo_ref[...],
                      preferred_element_type=jnp.float32) + bo_ref[...]
        o_ref[0] = out.astype(o_ref.dtype)


# ----------------------------- wrappers -------------------------------------

def pallas_linear(x2d, w_t, b, out_dtype=jnp.bfloat16):
    """(M, K) @ (K, N) + (N,) -> (M, N). Tiled, pipelined, f32 accumulation."""
    M, K = x2d.shape
    Kw, N = w_t.shape
    assert K == Kw
    # 512-class tiles: bf16 double-buffered working set ~5 MiB -> fits the
    # scoped VMEM default on v5e/v6e (32/128 MiB) and v7x (32/64 MiB).
    tm = _choose_tile(M, 512, 16)
    tn = _choose_tile(N, 512, 128)
    tk = _choose_tile(K, 512, 128)
    grid = (M // tm, N // tn, K // tk)
    return pl.pallas_call(
        _linear_kernel,
        out_shape=jax.ShapeDtypeStruct((M, N), out_dtype),
        grid_spec=pltpu.PrefetchScalarGridSpec(
            num_scalar_prefetch=0,
            grid=grid,
            in_specs=[
                pl.BlockSpec((tm, tk), lambda i, j, k: (i, k)),
                pl.BlockSpec((tk, tn), lambda i, j, k: (k, j)),
                pl.BlockSpec((1, tn), lambda i, j, k: (0, j)),
            ],
            out_specs=pl.BlockSpec((tm, tn), lambda i, j, k: (i, j)),
            scratch_shapes=[pltpu.VMEM((tm, tn), jnp.float32)],
        ),
        compiler_params=pltpu.CompilerParams(
            dimension_semantics=("parallel", "parallel", "arbitrary")),
    )(x2d, w_t, b.reshape(1, N))


def prepare_params(params, num_heads):
    """One-time (outside jit) weight prep: pre-transpose to (K, N), fold the
    softmax scale into wq/bq, cast MXU weights to bf16 (biases stay f32 and
    are added after the f32 accumulation)."""
    qdim = params["wq"].shape[0]
    head_dim = qdim // num_heads
    scale = head_dim ** (-0.5)
    return {
        "wq_t": (params["wq"] * scale).T.astype(jnp.bfloat16),
        "bq_s": (params["bq"] * scale).reshape(1, qdim).astype(jnp.float32),
        "wkv_t": params["wkv"].T.astype(jnp.bfloat16),
        "bkv": params["bkv"].astype(jnp.float32),
        "wo_t": params["wo"].T.astype(jnp.bfloat16),
        "bo": params["bo"].reshape(1, qdim).astype(jnp.float32),
    }


@functools.partial(jax.jit, static_argnames=("num_heads",))
def cross_attention(x, y, prepared, num_heads):
    """Pallas implementation of CrossAttention.forward (returns a 1-tuple)."""
    b, s1, qdim = x.shape
    _, s2, kdim = y.shape
    assert qdim % num_heads == 0
    head_dim = qdim // num_heads
    assert head_dim % 8 == 0 and head_dim <= 128

    # kv projection -> bf16 intermediate (halves HBM traffic for kv).
    kv = pallas_linear(y.reshape(b * s2, kdim), prepared["wkv_t"],
                       prepared["bkv"], out_dtype=jnp.bfloat16)
    kv = kv.reshape(b, s2, 2 * qdim)

    tq = _choose_tile(s1, 256, 16)
    tkv = _choose_tile(s2, 512, 16)
    attn_fn = functools.partial(_fused_attn_kernel, num_heads=num_heads,
                                head_dim=head_dim, qdim=qdim)
    out = pl.pallas_call(
        attn_fn,
        out_shape=jax.ShapeDtypeStruct((b, s1, qdim), x.dtype),
        grid_spec=pltpu.PrefetchScalarGridSpec(
            num_scalar_prefetch=0,
            grid=(b, s1 // tq, s2 // tkv),
            in_specs=[
                pl.BlockSpec((1, tq, qdim), lambda bi, qi, ki: (bi, qi, 0)),
                pl.BlockSpec((1, tkv, 2 * qdim), lambda bi, qi, ki: (bi, ki, 0)),
                pl.BlockSpec((qdim, qdim), lambda bi, qi, ki: (0, 0)),
                pl.BlockSpec((1, qdim), lambda bi, qi, ki: (0, 0)),
                pl.BlockSpec((qdim, qdim), lambda bi, qi, ki: (0, 0)),
                pl.BlockSpec((1, qdim), lambda bi, qi, ki: (0, 0)),
            ],
            out_specs=pl.BlockSpec((1, tq, qdim), lambda bi, qi, ki: (bi, qi, 0)),
            scratch_shapes=[
                pltpu.VMEM((tq, qdim), jnp.bfloat16),          # q tile
                pltpu.VMEM((num_heads, tq, 1), jnp.float32),   # running max m
                pltpu.VMEM((num_heads, tq, 1), jnp.float32),   # running sum l
                pltpu.VMEM((tq, qdim), jnp.float32),           # acc
            ],
        ),
        compiler_params=pltpu.CompilerParams(
            dimension_semantics=("parallel", "parallel", "arbitrary")),
    )(x, kv, prepared["wq_t"], prepared["bq_s"],
      prepared["wo_t"], prepared["bo"])
    return (out,)


# ----------------------------- param init ----------------------------------

def init_params(key, qdim, kdim):
    """Deterministic nn.Linear-style init (uniform(-1/sqrt(fan_in), +1/sqrt(fan_in)))."""
    ks = jax.random.split(key, 6)

    def lin(kw, kb, out_f, in_f):
        bound = 1.0 / math.sqrt(in_f)
        w = jax.random.uniform(kw, (out_f, in_f), jnp.float32, -bound, bound)
        b = jax.random.uniform(kb, (out_f,), jnp.float32, -bound, bound)
        return w, b

    wq, bq = lin(ks[0], ks[1], qdim, qdim)
    wkv, bkv = lin(ks[2], ks[3], 2 * qdim, kdim)
    wo, bo = lin(ks[4], ks[5], qdim, qdim)
    return {"wq": wq, "bq": bq, "wkv": wkv, "bkv": bkv, "wo": wo, "bo": bo}


# ----------------------------- reference (plain JAX, f32) -------------------

def reference(x, y, params, num_heads):
    b, s1, qdim = x.shape
    _, s2, _ = y.shape
    hd = qdim // num_heads
    q = (x @ params["wq"].T + params["bq"]).reshape(b, s1, num_heads, hd)
    kv = (y @ params["wkv"].T + params["bkv"]).reshape(b, s2, 2, num_heads, hd)
    k, v = kv[:, :, 0], kv[:, :, 1]
    q = q * (hd ** -0.5)
    q = q.transpose(0, 2, 1, 3)
    k = k.transpose(0, 2, 1, 3)
    v = v.transpose(0, 2, 1, 3)
    attn = jax.nn.softmax(jnp.einsum("bhqd,bhkd->bhqk", q, k), axis=-1)
    ctx = jnp.einsum("bhqk,bhkd->bhqd", attn, v)
    ctx = ctx.transpose(0, 2, 1, 3).reshape(b, s1, qdim)
    return ctx @ params["wo"].T + params["bo"]


# ----------------------------- main ------------------------------------------

if __name__ == "__main__":
    B, S1, S2 = 2, 8, 16
    QDIM, KDIM, NUM_HEADS = 32, 24, 4   # head_dim = 8 (divisible by 8, <= 128)

    key = jax.random.PRNGKey(0)
    kx, ky, kp = jax.random.split(key, 3)
    x = jax.random.normal(kx, (B, S1, QDIM), jnp.float32)
    y = jax.random.normal(ky, (B, S2, KDIM), jnp.float32)
    params = init_params(kp, QDIM, KDIM)

    # One-time weight prep (pre-transpose / pre-scale / bf16) hoisted out of
    # the jitted forward.
    prepared = prepare_params(params, NUM_HEADS)

    (out,) = cross_attention(x, y, prepared, NUM_HEADS)
    out = jax.block_until_ready(out)

    ref = reference(x, y, params, NUM_HEADS)
    assert out.shape == (B, S1, QDIM)
    # bf16 weights/activations (f32 accumulation) vs. the exact f32 reference:
    # expected deviation well under 5e-2 at these magnitudes.
    assert jnp.allclose(out, ref, atol=5e-2, rtol=5e-2), "mismatch vs reference"

    print("KERNEL_OK")
</pallas_src>

<mosaic_0001>
module attributes {stable_mosaic.version = 11 : i64} {
  func.func @_linear_kernel(%arg0: i32, %arg1: i32, %arg2: i32, %arg3: memref<32x24xf32, #tpu.memory_space<vmem>>, %arg4: memref<24x64xbf16, #tpu.memory_space<vmem>>, %arg5: memref<1x64xf32, #tpu.memory_space<vmem>>, %arg6: memref<32x64xbf16, #tpu.memory_space<vmem>>, %arg7: memref<32x64xf32, #tpu.memory_space<vmem>>) attributes {dimension_semantics = [#tpu.dimension_semantics<parallel>, #tpu.dimension_semantics<parallel>, #tpu.dimension_semantics<arbitrary>], iteration_bounds = array<i64: 1, 1, 1>, scalar_prefetch = 0 : i64, scratch_operands = 1 : i64, tpu.core_type = #tpu.core_type<tc>, window_params = [{transform_indices = @transform_0, window_bounds = array<i64: 32, 24>}, {transform_indices = @transform_1, window_bounds = array<i64: 24, 64>}, {transform_indices = @transform_2, window_bounds = array<i64: 1, 64>}, {transform_indices = @transform_3, window_bounds = array<i64: 32, 64>}]} {
    %c0_i32 = arith.constant 0 : i32
    %0 = arith.cmpi eq, %arg2, %c0_i32 : i32
    %1 = arith.extui %0 : i1 to i32
    %c0_i32_0 = arith.constant 0 : i32
    %2 = arith.cmpi ne, %1, %c0_i32_0 : i32
    scf.if %2 {
      %cst_10 = arith.constant 0.000000e+00 : f32
      %13 = vector.broadcast %cst_10 : f32 to vector<32x64xf32>
      %c0_11 = arith.constant 0 : index
      %c0_12 = arith.constant 0 : index
      %14 = vector.load %arg7[%c0_11, %c0_12] : memref<32x64xf32, #tpu.memory_space<vmem>>, vector<32x64xf32>
      tpu.vector_store %arg7[%c0_11, %c0_12], %13 {strides = array<i32>} : memref<32x64xf32, #tpu.memory_space<vmem>>, vector<32x64xf32>,
    } else {
    }
    %c0 = arith.constant 0 : index
    %c0_1 = arith.constant 0 : index
    %3 = vector.load %arg7[%c0, %c0_1] : memref<32x64xf32, #tpu.memory_space<vmem>>, vector<32x64xf32>
    %c0_2 = arith.constant 0 : index
    %c0_3 = arith.constant 0 : index
    %4 = vector.load %arg3[%c0_2, %c0_3] : memref<32x24xf32, #tpu.memory_space<vmem>>, vector<32x24xf32>
    %5 = arith.truncf %4 : vector<32x24xf32> to vector<32x24xbf16>
    %c0_4 = arith.constant 0 : index
    %c0_5 = arith.constant 0 : index
    %6 = vector.load %arg4[%c0_4, %c0_5] : memref<24x64xbf16, #tpu.memory_space<vmem>>, vector<24x64xbf16>
    %cst = arith.constant dense<0.000000e+00> : vector<32x64xf32>
    %7 = tpu.matmul %5, %6, %cst {dimension_numbers = #tpu.dot_dimension_numbers<[1], [0], [0], [1], [0, 0, 1, 1], [], []>} : vector<32x24xbf16>, vector<24x64xbf16>, vector<32x64xf32> -> vector<32x64xf32>
    %8 = arith.addf %3, %7 : vector<32x64xf32>
    %c0_6 = arith.constant 0 : index
    %c0_7 = arith.constant 0 : index
    %9 = vector.load %arg7[%c0_6, %c0_7] : memref<32x64xf32, #tpu.memory_space<vmem>>, vector<32x64xf32>
    tpu.vector_store %arg7[%c0_6, %c0_7], %8 {strides = array<i32>} : memref<32x64xf32, #tpu.memory_space<vmem>>, vector<32x64xf32>,
    %c0_i32_8 = arith.constant 0 : i32
    %10 = arith.cmpi eq, %arg2, %c0_i32_8 : i32
    %11 = arith.extui %10 : i1 to i32
    %c0_i32_9 = arith.constant 0 : i32
    %12 = arith.cmpi ne, %11, %c0_i32_9 : i32
    scf.if %12 {
      %c0_10 = arith.constant 0 : index
      %c0_11 = arith.constant 0 : index
      %13 = vector.load %arg7[%c0_10, %c0_11] : memref<32x64xf32, #tpu.memory_space<vmem>>, vector<32x64xf32>
      %c0_12 = arith.constant 0 : index
      %c0_13 = arith.constant 0 : index
      %14 = vector.load %arg5[%c0_12, %c0_13] : memref<1x64xf32, #tpu.memory_space<vmem>>, vector<1x64xf32>
      %15 = vector.broadcast %14 : vector<1x64xf32> to vector<32x64xf32>
      %16 = arith.addf %13, %15 : vector<32x64xf32>
      %17 = arith.truncf %16 : vector<32x64xf32> to vector<32x64xbf16>
      %c0_14 = arith.constant 0 : index
      %c0_15 = arith.constant 0 : index
      %18 = vector.load %arg6[%c0_14, %c0_15] : memref<32x64xbf16, #tpu.memory_space<vmem>>, vector<32x64xbf16>
      tpu.vector_store %arg6[%c0_14, %c0_15], %17 {strides = array<i32>} : memref<32x64xbf16, #tpu.memory_space<vmem>>, vector<32x64xbf16>,
    } else {
    }
    return
  }
  func.func @transform_0(%arg0: i32, %arg1: i32, %arg2: i32) -> (i32, i32) {
    %c0_i32 = arith.constant 0 : i32
    return %arg0, %arg2 : i32, i32
  }
  func.func @transform_1(%arg0: i32, %arg1: i32, %arg2: i32) -> (i32, i32) {
    %c0_i32 = arith.constant 0 : i32
    return %arg2, %arg1 : i32, i32
  }
  func.func @transform_2(%arg0: i32, %arg1: i32, %arg2: i32) -> (i32, i32) {
    %c0_i32 = arith.constant 0 : i32
    %c0_i32_0 = arith.constant 0 : i32
    return %c0_i32, %arg1 : i32, i32
  }
  func.func @transform_3(%arg0: i32, %arg1: i32, %arg2: i32) -> (i32, i32) {
    %c0_i32 = arith.constant 0 : i32
    return %arg0, %arg1 : i32, i32
  }
}

module attributes {stable_mosaic.version = 11 : i64} {
  func.func @_fused_attn_kernel(%arg0: i32, %arg1: i32, %arg2: i32, %arg3: memref<1x8x32xf32, #tpu.memory_space<vmem>>, %arg4: memref<1x16x64xbf16, #tpu.memory_space<vmem>>, %arg5: memref<32x32xbf16, #tpu.memory_space<vmem>>, %arg6: memref<1x32xf32, #tpu.memory_space<vmem>>, %arg7: memref<32x32xbf16, #tpu.memory_space<vmem>>, %arg8: memref<1x32xf32, #tpu.memory_space<vmem>>, %arg9: memref<1x8x32xf32, #tpu.memory_space<vmem>>, %arg10: memref<8x32xbf16, #tpu.memory_space<vmem>>, %arg11: memref<4x8x1xf32, #tpu.memory_space<vmem>>, %arg12: memref<4x8x1xf32, #tpu.memory_space<vmem>>, %arg13: memref<8x32xf32, #tpu.memory_space<vmem>>) attributes {dimension_semantics = [#tpu.dimension_semantics<parallel>, #tpu.dimension_semantics<parallel>, #tpu.dimension_semantics<arbitrary>], iteration_bounds = array<i64: 2, 1, 1>, scalar_prefetch = 0 : i64, scratch_operands = 4 : i64, tpu.core_type = #tpu.core_type<tc>, window_params = [{transform_indices = @transform_0, window_bounds = array<i64: 1, 8, 32>}, {transform_indices = @transform_1, window_bounds = array<i64: 1, 16, 64>}, {pipeline_mode = #tpu.pipeline_mode<synchronous>, transform_indices = @transform_2, window_bounds = array<i64: 32, 32>}, {pipeline_mode = #tpu.pipeline_mode<synchronous>, transform_indices = @transform_3, window_bounds = array<i64: 1, 32>}, {pipeline_mode = #tpu.pipeline_mode<synchronous>, transform_indices = @transform_4, window_bounds = array<i64: 32, 32>}, {pipeline_mode = #tpu.pipeline_mode<synchronous>, transform_indices = @transform_5, window_bounds = array<i64: 1, 32>}, {transform_indices = @transform_6, window_bounds = array<i64: 1, 8, 32>}]} {
    %c0_i32 = arith.constant 0 : i32
    %0 = arith.cmpi eq, %arg2, %c0_i32 : i32
    %1 = arith.extui %0 : i1 to i32
    %c0_i32_0 = arith.constant 0 : i32
    %2 = arith.cmpi ne, %1, %c0_i32_0 : i32
    scf.if %2 {
      %c0_86 = arith.constant 0 : index
      %c0_87 = arith.constant 0 : index
      %c0_88 = arith.constant 0 : index
      %140 = vector.load %arg3[%c0_86, %c0_87, %c0_88] : memref<1x8x32xf32, #tpu.memory_space<vmem>>, vector<1x8x32xf32>
      %141 = vector.shape_cast %140 : vector<1x8x32xf32> to vector<8x32xf32>
      %142 = arith.truncf %141 : vector<8x32xf32> to vector<8x32xbf16>
      %c0_89 = arith.constant 0 : index
      %c0_90 = arith.constant 0 : index
      %143 = vector.load %arg5[%c0_89, %c0_90] : memref<32x32xbf16, #tpu.memory_space<vmem>>, vector<32x32xbf16>
      %cst_91 = arith.constant dense<0.000000e+00> : vector<8x32xf32>
      %144 = tpu.matmul %142, %143, %cst_91 {dimension_numbers = #tpu.dot_dimension_numbers<[1], [0], [0], [1], [0, 0, 1, 1], [], []>} : vector<8x32xbf16>, vector<32x32xbf16>, vector<8x32xf32> -> vector<8x32xf32>
      %c0_92 = arith.constant 0 : index
      %c0_93 = arith.constant 0 : index
      %145 = vector.load %arg6[%c0_92, %c0_93] : memref<1x32xf32, #tpu.memory_space<vmem>>, vector<1x32xf32>
      %146 = vector.broadcast %145 : vector<1x32xf32> to vector<8x32xf32>
      %147 = arith.addf %144, %146 : vector<8x32xf32>
      %148 = arith.truncf %147 : vector<8x32xf32> to vector<8x32xbf16>
      %c0_94 = arith.constant 0 : index
      %c0_95 = arith.constant 0 : index
      %149 = vector.load %arg10[%c0_94, %c0_95] : memref<8x32xbf16, #tpu.memory_space<vmem>>, vector<8x32xbf16>
      tpu.vector_store %arg10[%c0_94, %c0_95], %148 {strides = array<i32>} : memref<8x32xbf16, #tpu.memory_space<vmem>>, vector<8x32xbf16>,
      %cst_96 = arith.constant 0xFF800000 : f32
      %150 = vector.broadcast %cst_96 : f32 to vector<4x8x1xf32>
      %c0_97 = arith.constant 0 : index
      %c0_98 = arith.constant 0 : index
      %c0_99 = arith.constant 0 : index
      %151 = vector.load %arg11[%c0_97, %c0_98, %c0_99] : memref<4x8x1xf32, #tpu.memory_space<vmem>>, vector<4x8x1xf32>
      tpu.vector_store %arg11[%c0_97, %c0_98, %c0_99], %150 {strides = array<i32>} : memref<4x8x1xf32, #tpu.memory_space<vmem>>, vector<4x8x1xf32>,
      %cst_100 = arith.constant 0.000000e+00 : f32
      %152 = vector.broadcast %cst_100 : f32 to vector<4x8x1xf32>
      %c0_101 = arith.constant 0 : index
      %c0_102 = arith.constant 0 : index
      %c0_103 = arith.constant 0 : index
      %153 = vector.load %arg12[%c0_101, %c0_102, %c0_103] : memref<4x8x1xf32, #tpu.memory_space<vmem>>, vector<4x8x1xf32>
      tpu.vector_store %arg12[%c0_101, %c0_102, %c0_103], %152 {strides = array<i32>} : memref<4x8x1xf32, #tpu.memory_space<vmem>>, vector<4x8x1xf32>,
      %cst_104 = arith.constant 0.000000e+00 : f32
      %154 = vector.broadcast %cst_104 : f32 to vector<8x32xf32>
      %c0_105 = arith.constant 0 : index
      %c0_106 = arith.constant 0 : index
      %155 = vector.load %arg13[%c0_105, %c0_106] : memref<8x32xf32, #tpu.memory_space<vmem>>, vector<8x32xf32>
      tpu.vector_store %arg13[%c0_105, %c0_106], %154 {strides = array<i32>} : memref<8x32xf32, #tpu.memory_space<vmem>>, vector<8x32xf32>,
    } else {
    }
    %c0 = arith.constant 0 : index
    %c0_1 = arith.constant 0 : index
    %c0_2 = arith.constant 0 : index
    %3 = vector.load %arg4[%c0, %c0_1, %c0_2] : memref<1x16x64xbf16, #tpu.memory_space<vmem>>, vector<1x16x64xbf16>
    %4 = vector.shape_cast %3 : vector<1x16x64xbf16> to vector<16x64xbf16>
    %c0_3 = arith.constant 0 : index
    %c0_4 = arith.constant 0 : index
    %5 = vector.load %arg10[%c0_3, %c0_4] : memref<8x32xbf16, #tpu.memory_space<vmem>>, vector<8x8xbf16>
    %6 = vector.extract_strided_slice %4 {offsets = [0, 0], sizes = [16, 8], strides = [1, 1]} : vector<16x64xbf16> to vector<16x8xbf16>
    %7 = vector.extract_strided_slice %4 {offsets = [0, 32], sizes = [16, 8], strides = [1, 1]} : vector<16x64xbf16> to vector<16x8xbf16>
    %cst = arith.constant dense<0.000000e+00> : vector<8x16xf32>
    %8 = tpu.matmul %5, %6, %cst {dimension_numbers = #tpu.dot_dimension_numbers<[1], [1], [0], [0], [0, 0, 1, 0], [], []>} : vector<8x8xbf16>, vector<16x8xbf16>, vector<8x16xf32> -> vector<8x16xf32>
    %c0_5 = arith.constant 0 : index
    %c0_6 = arith.constant 0 : index
    %c0_7 = arith.constant 0 : index
    %9 = vector.load %arg11[%c0_5, %c0_6, %c0_7] : memref<4x8x1xf32, #tpu.memory_space<vmem>>, vector<1x8x1xf32>
    %10 = vector.shape_cast %9 : vector<1x8x1xf32> to vector<8x1xf32>
    %cst_8 = arith.constant dense<0xFF800000> : vector<8xf32>
    %11 = vector.multi_reduction <maximumf>, %8, %cst_8 [1] : vector<8x16xf32> to vector<8xf32>
    %12 = vector.shape_cast %11 : vector<8xf32> to vector<8x1xf32>
    %13 = arith.maximumf %10, %12 : vector<8x1xf32>
    %14 = arith.subf %10, %13 : vector<8x1xf32>
    %15 = math.exp %14 : vector<8x1xf32>
    %16 = vector.broadcast %13 : vector<8x1xf32> to vector<8x16xf32>
    %17 = arith.subf %8, %16 : vector<8x16xf32>
    %18 = math.exp %17 : vector<8x16xf32>
    %c0_9 = arith.constant 0 : index
    %c0_10 = arith.constant 0 : index
    %c0_11 = arith.constant 0 : index
    %19 = vector.load %arg12[%c0_9, %c0_10, %c0_11] : memref<4x8x1xf32, #tpu.memory_space<vmem>>, vector<1x8x1xf32>
    %20 = vector.shape_cast %19 : vector<1x8x1xf32> to vector<8x1xf32>
    %21 = arith.mulf %15, %20 : vector<8x1xf32>
    %cst_12 = arith.constant dense<0.000000e+00> : vector<8xf32>
    %22 = vector.multi_reduction <add>, %18, %cst_12 [1] : vector<8x16xf32> to vector<8xf32>
    %23 = vector.shape_cast %22 : vector<8xf32> to vector<8x1xf32>
    %24 = arith.addf %21, %23 : vector<8x1xf32>
    %c0_13 = arith.constant 0 : index
    %c0_14 = arith.constant 0 : index
    %c0_15 = arith.constant 0 : index
    %25 = vector.load %arg12[%c0_13, %c0_14, %c0_15] : memref<4x8x1xf32, #tpu.memory_space<vmem>>, vector<1x8x1xf32>
    %26 = vector.shape_cast %25 : vector<1x8x1xf32> to vector<8x1xf32>
    %27 = vector.shape_cast %24 : vector<8x1xf32> to vector<1x8x1xf32>
    tpu.vector_store %arg12[%c0_13, %c0_14, %c0_15], %27 {strides = array<i32>} : memref<4x8x1xf32, #tpu.memory_space<vmem>>, vector<1x8x1xf32>,
    %c0_16 = arith.constant 0 : index
    %c0_17 = arith.constant 0 : index
    %28 = vector.load %arg13[%c0_16, %c0_17] : memref<8x32xf32, #tpu.memory_space<vmem>>, vector<8x8xf32>
    %29 = vector.broadcast %15 : vector<8x1xf32> to vector<8x8xf32>
    %30 = arith.mulf %29, %28 : vector<8x8xf32>
    %31 = arith.truncf %18 : vector<8x16xf32> to vector<8x16xbf16>
    %cst_18 = arith.constant dense<0.000000e+00> : vector<8x8xf32>
    %32 = tpu.matmul %31, %7, %cst_18 {dimension_numbers = #tpu.dot_dimension_numbers<[1], [0], [0], [1], [0, 0, 1, 1], [], []>} : vector<8x16xbf16>, vector<16x8xbf16>, vector<8x8xf32> -> vector<8x8xf32>
    %33 = arith.addf %30, %32 : vector<8x8xf32>
    %c0_19 = arith.constant 0 : index
    %c0_20 = arith.constant 0 : index
    %34 = vector.load %arg13[%c0_19, %c0_20] : memref<8x32xf32, #tpu.memory_space<vmem>>, vector<8x8xf32>
    tpu.vector_store %arg13[%c0_19, %c0_20], %33 {strides = array<i32>} : memref<8x32xf32, #tpu.memory_space<vmem>>, vector<8x8xf32>,
    %c0_21 = arith.constant 0 : index
    %c0_22 = arith.constant 0 : index
    %c0_23 = arith.constant 0 : index
    %35 = vector.load %arg11[%c0_21, %c0_22, %c0_23] : memref<4x8x1xf32, #tpu.memory_space<vmem>>, vector<1x8x1xf32>
    %36 = vector.shape_cast %35 : vector<1x8x1xf32> to vector<8x1xf32>
    %37 = vector.shape_cast %13 : vector<8x1xf32> to vector<1x8x1xf32>
    tpu.vector_store %arg11[%c0_21, %c0_22, %c0_23], %37 {strides = array<i32>} : memref<4x8x1xf32, #tpu.memory_space<vmem>>, vector<1x8x1xf32>,
    %c0_24 = arith.constant 0 : index
    %c8 = arith.constant 8 : index
    %38 = vector.load %arg10[%c0_24, %c8] : memref<8x32xbf16, #tpu.memory_space<vmem>>, vector<8x8xbf16>
    %39 = vector.extract_strided_slice %4 {offsets = [0, 8], sizes = [16, 8], strides = [1, 1]} : vector<16x64xbf16> to vector<16x8xbf16>
    %40 = vector.extract_strided_slice %4 {offsets = [0, 40], sizes = [16, 8], strides = [1, 1]} : vector<16x64xbf16> to vector<16x8xbf16>
    %cst_25 = arith.constant dense<0.000000e+00> : vector<8x16xf32>
    %41 = tpu.matmul %38, %39, %cst_25 {dimension_numbers = #tpu.dot_dimension_numbers<[1], [1], [0], [0], [0, 0, 1, 0], [], []>} : vector<8x8xbf16>, vector<16x8xbf16>, vector<8x16xf32> -> vector<8x16xf32>
    %c1 = arith.constant 1 : index
    %c0_26 = arith.constant 0 : index
    %c0_27 = arith.constant 0 : index
    %42 = vector.load %arg11[%c1, %c0_26, %c0_27] : memref<4x8x1xf32, #tpu.memory_space<vmem>>, vector<1x8x1xf32>
    %43 = vector.shape_cast %42 : vector<1x8x1xf32> to vector<8x1xf32>
    %cst_28 = arith.constant dense<0xFF800000> : vector<8xf32>
    %44 = vector.multi_reduction <maximumf>, %41, %cst_28 [1] : vector<8x16xf32> to vector<8xf32>
    %45 = vector.shape_cast %44 : vector<8xf32> to vector<8x1xf32>
    %46 = arith.maximumf %43, %45 : vector<8x1xf32>
    %47 = arith.subf %43, %46 : vector<8x1xf32>
    %48 = math.exp %47 : vector<8x1xf32>
    %49 = vector.broadcast %46 : vector<8x1xf32> to vector<8x16xf32>
    %50 = arith.subf %41, %49 : vector<8x16xf32>
    %51 = math.exp %50 : vector<8x16xf32>
    %c1_29 = arith.constant 1 : index
    %c0_30 = arith.constant 0 : index
    %c0_31 = arith.constant 0 : index
    %52 = vector.load %arg12[%c1_29, %c0_30, %c0_31] : memref<4x8x1xf32, #tpu.memory_space<vmem>>, vector<1x8x1xf32>
    %53 = vector.shape_cast %52 : vector<1x8x1xf32> to vector<8x1xf32>
    %54 = arith.mulf %48, %53 : vector<8x1xf32>
    %cst_32 = arith.constant dense<0.000000e+00> : vector<8xf32>
    %55 = vector.multi_reduction <add>, %51, %cst_32 [1] : vector<8x16xf32> to vector<8xf32>
    %56 = vector.shape_cast %55 : vector<8xf32> to vector<8x1xf32>
    %57 = arith.addf %54, %56 : vector<8x1xf32>
    %c1_33 = arith.constant 1 : index
    %c0_34 = arith.constant 0 : index
    %c0_35 = arith.constant 0 : index
    %58 = vector.load %arg12[%c1_33, %c0_34, %c0_35] : memref<4x8x1xf32, #tpu.memory_space<vmem>>, vector<1x8x1xf32>
    %59 = vector.shape_cast %58 : vector<1x8x1xf32> to vector<8x1xf32>
    %60 = vector.shape_cast %57 : vector<8x1xf32> to vector<1x8x1xf32>
    tpu.vector_store %arg12[%c1_33, %c0_34, %c0_35], %60 {strides = array<i32>} : memref<4x8x1xf32, #tpu.memory_space<vmem>>, vector<1x8x1xf32>,
    %c0_36 = arith.constant 0 : index
    %c8_37 = arith.constant 8 : index
    %61 = vector.load %arg13[%c0_36, %c8_37] : memref<8x32xf32, #tpu.memory_space<vmem>>, vector<8x8xf32>
    %62 = vector.broadcast %48 : vector<8x1xf32> to vector<8x8xf32>
    %63 = arith.mulf %62, %61 : vector<8x8xf32>
    %64 = arith.truncf %51 : vector<8x16xf32> to vector<8x16xbf16>
    %cst_38 = arith.constant dense<0.000000e+00> : vector<8x8xf32>
    %65 = tpu.matmul %64, %40, %cst_38 {dimension_numbers = #tpu.dot_dimension_numbers<[1], [0], [0], [1], [0, 0, 1, 1], [], []>} : vector<8x16xbf16>, vector<16x8xbf16>, vector<8x8xf32> -> vector<8x8xf32>
    %66 = arith.addf %63, %65 : vector<8x8xf32>
    %c0_39 = arith.constant 0 : index
    %c8_40 = arith.constant 8 : index
    %67 = vector.load %arg13[%c0_39, %c8_40] : memref<8x32xf32, #tpu.memory_space<vmem>>, vector<8x8xf32>
    tpu.vector_store %arg13[%c0_39, %c8_40], %66 {strides = array<i32>} : memref<8x32xf32, #tpu.memory_space<vmem>>, vector<8x8xf32>,
    %c1_41 = arith.constant 1 : index
    %c0_42 = arith.constant 0 : index
    %c0_43 = arith.constant 0 : index
    %68 = vector.load %arg11[%c1_41, %c0_42, %c0_43] : memref<4x8x1xf32, #tpu.memory_space<vmem>>, vector<1x8x1xf32>
    %69 = vector.shape_cast %68 : vector<1x8x1xf32> to vector<8x1xf32>
    %70 = vector.shape_cast %46 : vector<8x1xf32> to vector<1x8x1xf32>
    tpu.vector_store %arg11[%c1_41, %c0_42, %c0_43], %70 {strides = array<i32>} : memref<4x8x1xf32, #tpu.memory_space<vmem>>, vector<1x8x1xf32>,
    %c0_44 = arith.constant 0 : index
    %c16 = arith.constant 16 : index
    %71 = vector.load %arg10[%c0_44, %c16] : memref<8x32xbf16, #tpu.memory_space<vmem>>, vector<8x8xbf16>
    %72 = vector.extract_strided_slice %4 {offsets = [0, 16], sizes = [16, 8], strides = [1, 1]} : vector<16x64xbf16> to vector<16x8xbf16>
    %73 = vector.extract_strided_slice %4 {offsets = [0, 48], sizes = [16, 8], strides = [1, 1]} : vector<16x64xbf16> to vector<16x8xbf16>
    %cst_45 = arith.constant dense<0.000000e+00> : vector<8x16xf32>
    %74 = tpu.matmul %71, %72, %cst_45 {dimension_numbers = #tpu.dot_dimension_numbers<[1], [1], [0], [0], [0, 0, 1, 0], [], []>} : vector<8x8xbf16>, vector<16x8xbf16>, vector<8x16xf32> -> vector<8x16xf32>
    %c2 = arith.constant 2 : index
    %c0_46 = arith.constant 0 : index
    %c0_47 = arith.constant 0 : index
    %75 = vector.load %arg11[%c2, %c0_46, %c0_47] : memref<4x8x1xf32, #tpu.memory_space<vmem>>, vector<1x8x1xf32>
    %76 = vector.shape_cast %75 : vector<1x8x1xf32> to vector<8x1xf32>
    %cst_48 = arith.constant dense<0xFF800000> : vector<8xf32>
    %77 = vector.multi_reduction <maximumf>, %74, %cst_48 [1] : vector<8x16xf32> to vector<8xf32>
    %78 = vector.shape_cast %77 : vector<8xf32> to vector<8x1xf32>
    %79 = arith.maximumf %76, %78 : vector<8x1xf32>
    %80 = arith.subf %76, %79 : vector<8x1xf32>
    %81 = math.exp %80 : vector<8x1xf32>
    %82 = vector.broadcast %79 : vector<8x1xf32> to vector<8x16xf32>
    %83 = arith.subf %74, %82 : vector<8x16xf32>
    %84 = math.exp %83 : vector<8x16xf32>
    %c2_49 = arith.constant 2 : index
    %c0_50 = arith.constant 0 : index
    %c0_51 = arith.constant 0 : index
    %85 = vector.load %arg12[%c2_49, %c0_50, %c0_51] : memref<4x8x1xf32, #tpu.memory_space<vmem>>, vector<1x8x1xf32>
    %86 = vector.shape_cast %85 : vector<1x8x1xf32> to vector<8x1xf32>
    %87 = arith.mulf %81, %86 : vector<8x1xf32>
    %cst_52 = arith.constant dense<0.000000e+00> : vector<8xf32>
    %88 = vector.multi_reduction <add>, %84, %cst_52 [1] : vector<8x16xf32> to vector<8xf32>
    %89 = vector.shape_cast %88 : vector<8xf32> to vector<8x1xf32>
    %90 = arith.addf %87, %89 : vector<8x1xf32>
    %c2_53 = arith.constant 2 : index
    %c0_54 = arith.constant 0 : index
    %c0_55 = arith.constant 0 : index
    %91 = vector.load %arg12[%c2_53, %c0_54, %c0_55] : memref<4x8x1xf32, #tpu.memory_space<vmem>>, vector<1x8x1xf32>
    %92 = vector.shape_cast %91 : vector<1x8x1xf32> to vector<8x1xf32>
    %93 = vector.shape_cast %90 : vector<8x1xf32> to vector<1x8x1xf32>
    tpu.vector_store %arg12[%c2_53, %c0_54, %c0_55], %93 {strides = array<i32>} : memref<4x8x1xf32, #tpu.memory_space<vmem>>, vector<1x8x1xf32>,
    %c0_56 = arith.constant 0 : index
    %c16_57 = arith.constant 16 : index
    %94 = vector.load %arg13[%c0_56, %c16_57] : memref<8x32xf32, #tpu.memory_space<vmem>>, vector<8x8xf32>
    %95 = vector.broadcast %81 : vector<8x1xf32> to vector<8x8xf32>
    %96 = arith.mulf %95, %94 : vector<8x8xf32>
    %97 = arith.truncf %84 : vector<8x16xf32> to vector<8x16xbf16>
    %cst_58 = arith.constant dense<0.000000e+00> : vector<8x8xf32>
    %98 = tpu.matmul %97, %73, %cst_58 {dimension_numbers = #tpu.dot_dimension_numbers<[1], [0], [0], [1], [0, 0, 1, 1], [], []>} : vector<8x16xbf16>, vector<16x8xbf16>, vector<8x8xf32> -> vector<8x8xf32>
    %99 = arith.addf %96, %98 : vector<8x8xf32>
    %c0_59 = arith.constant 0 : index
    %c16_60 = arith.constant 16 : index
    %100 = vector.load %arg13[%c0_59, %c16_60] : memref<8x32xf32, #tpu.memory_space<vmem>>, vector<8x8xf32>
    tpu.vector_store %arg13[%c0_59, %c16_60], %99 {strides = array<i32>} : memref<8x32xf32, #tpu.memory_space<vmem>>, vector<8x8xf32>,
    %c2_61 = arith.constant 2 : index
    %c0_62 = arith.constant 0 : index
    %c0_63 = arith.constant 0 : index
    %101 = vector.load %arg11[%c2_61, %c0_62, %c0_63] : memref<4x8x1xf32, #tpu.memory_space<vmem>>, vector<1x8x1xf32>
    %102 = vector.shape_cast %101 : vector<1x8x1xf32> to vector<8x1xf32>
    %103 = vector.shape_cast %79 : vector<8x1xf32> to vector<1x8x1xf32>
    tpu.vector_store %arg11[%c2_61, %c0_62, %c0_63], %103 {strides = array<i32>} : memref<4x8x1xf32, #tpu.memory_space<vmem>>, vector<1x8x1xf32>,
    %c0_64 = arith.constant 0 : index
    %c24 = arith.constant 24 : index
    %104 = vector.load %arg10[%c0_64, %c24] : memref<8x32xbf16, #tpu.memory_space<vmem>>, vector<8x8xbf16>
    %105 = vector.extract_strided_slice %4 {offsets = [0, 24], sizes = [16, 8], strides = [1, 1]} : vector<16x64xbf16> to vector<16x8xbf16>
    %106 = vector.extract_strided_slice %4 {offsets = [0, 56], sizes = [16, 8], strides = [1, 1]} : vector<16x64xbf16> to vector<16x8xbf16>
    %cst_65 = arith.constant dense<0.000000e+00> : vector<8x16xf32>
    %107 = tpu.matmul %104, %105, %cst_65 {dimension_numbers = #tpu.dot_dimension_numbers<[1], [1], [0], [0], [0, 0, 1, 0], [], []>} : vector<8x8xbf16>, vector<16x8xbf16>, vector<8x16xf32> -> vector<8x16xf32>
    %c3 = arith.constant 3 : index
    %c0_66 = arith.constant 0 : index
    %c0_67 = arith.constant 0 : index
    %108 = vector.load %arg11[%c3, %c0_66, %c0_67] : memref<4x8x1xf32, #tpu.memory_space<vmem>>, vector<1x8x1xf32>
    %109 = vector.shape_cast %108 : vector<1x8x1xf32> to vector<8x1xf32>
    %cst_68 = arith.constant dense<0xFF800000> : vector<8xf32>
    %110 = vector.multi_reduction <maximumf>, %107, %cst_68 [1] : vector<8x16xf32> to vector<8xf32>
    %111 = vector.shape_cast %110 : vector<8xf32> to vector<8x1xf32>
    %112 = arith.maximumf %109, %111 : vector<8x1xf32>
    %113 = arith.subf %109, %112 : vector<8x1xf32>
    %114 = math.exp %113 : vector<8x1xf32>
    %115 = vector.broadcast %112 : vector<8x1xf32> to vector<8x16xf32>
    %116 = arith.subf %107, %115 : vector<8x16xf32>
    %117 = math.exp %116 : vector<8x16xf32>
    %c3_69 = arith.constant 3 : index
    %c0_70 = arith.constant 0 : index
    %c0_71 = arith.constant 0 : index
    %118 = vector.load %arg12[%c3_69, %c0_70, %c0_71] : memref<4x8x1xf32, #tpu.memory_space<vmem>>, vector<1x8x1xf32>
    %119 = vector.shape_cast %118 : vector<1x8x1xf32> to vector<8x1xf32>
    %120 = arith.mulf %114, %119 : vector<8x1xf32>
    %cst_72 = arith.constant dense<0.000000e+00> : vector<8xf32>
    %121 = vector.multi_reduction <add>, %117, %cst_72 [1] : vector<8x16xf32> to vector<8xf32>
    %122 = vector.shape_cast %121 : vector<8xf32> to vector<8x1xf32>
    %123 = arith.addf %120, %122 : vector<8x1xf32>
    %c3_73 = arith.constant 3 : index
    %c0_74 = arith.constant 0 : index
    %c0_75 = arith.constant 0 : index
    %124 = vector.load %arg12[%c3_73, %c0_74, %c0_75] : memref<4x8x1xf32, #tpu.memory_space<vmem>>, vector<1x8x1xf32>
    %125 = vector.shape_cast %124 : vector<1x8x1xf32> to vector<8x1xf32>
    %126 = vector.shape_cast %123 : vector<8x1xf32> to vector<1x8x1xf32>
    tpu.vector_store %arg12[%c3_73, %c0_74, %c0_75], %126 {strides = array<i32>} : memref<4x8x1xf32, #tpu.memory_space<vmem>>, vector<1x8x1xf32>,
    %c0_76 = arith.constant 0 : index
    %c24_77 = arith.constant 24 : index
    %127 = vector.load %arg13[%c0_76, %c24_77] : memref<8x32xf32, #tpu.memory_space<vmem>>, vector<8x8xf32>
    %128 = vector.broadcast %114 : vector<8x1xf32> to vector<8x8xf32>
    %129 = arith.mulf %128, %127 : vector<8x8xf32>
    %130 = arith.truncf %117 : vector<8x16xf32> to vector<8x16xbf16>
    %cst_78 = arith.constant dense<0.000000e+00> : vector<8x8xf32>
    %131 = tpu.matmul %130, %106, %cst_78 {dimension_numbers = #tpu.dot_dimension_numbers<[1], [0], [0], [1], [0, 0, 1, 1], [], []>} : vector<8x16xbf16>, vector<16x8xbf16>, vector<8x8xf32> -> vector<8x8xf32>
    %132 = arith.addf %129, %131 : vector<8x8xf32>
    %c0_79 = arith.constant 0 : index
    %c24_80 = arith.constant 24 : index
    %133 = vector.load %arg13[%c0_79, %c24_80] : memref<8x32xf32, #tpu.memory_space<vmem>>, vector<8x8xf32>
    tpu.vector_store %arg13[%c0_79, %c24_80], %132 {strides = array<i32>} : memref<8x32xf32, #tpu.memory_space<vmem>>, vector<8x8xf32>,
    %c3_81 = arith.constant 3 : index
    %c0_82 = arith.constant 0 : index
    %c0_83 = arith.constant 0 : index
    %134 = vector.load %arg11[%c3_81, %c0_82, %c0_83] : memref<4x8x1xf32, #tpu.memory_space<vmem>>, vector<1x8x1xf32>
    %135 = vector.shape_cast %134 : vector<1x8x1xf32> to vector<8x1xf32>
    %136 = vector.shape_cast %112 : vector<8x1xf32> to vector<1x8x1xf32>
    tpu.vector_store %arg11[%c3_81, %c0_82, %c0_83], %136 {strides = array<i32>} : memref<4x8x1xf32, #tpu.memory_space<vmem>>, vector<1x8x1xf32>,
    %c0_i32_84 = arith.constant 0 : i32
    %137 = arith.cmpi eq, %arg2, %c0_i32_84 : i32
    %138 = arith.extui %137 : i1 to i32
    %c0_i32_85 = arith.constant 0 : i32
    %139 = arith.cmpi ne, %138, %c0_i32_85 : i32
    scf.if %139 {
      %c0_86 = arith.constant 0 : index
      %c0_87 = arith.constant 0 : index
      %c0_88 = arith.constant 0 : index
      %140 = vector.load %arg12[%c0_86, %c0_87, %c0_88] : memref<4x8x1xf32, #tpu.memory_space<vmem>>, vector<1x8x1xf32>
      %141 = vector.shape_cast %140 : vector<1x8x1xf32> to vector<8x1xf32>
      %142 = tpu.reciprocal %141 {approx = true} : vector<8x1xf32> -> vector<8x1xf32>
      %143 = arith.mulf %141, %142 : vector<8x1xf32>
      %cst_89 = arith.constant 2.000000e+00 : f32
      %144 = vector.broadcast %cst_89 : f32 to vector<8x1xf32>
      %145 = arith.subf %144, %143 : vector<8x1xf32>
      %146 = arith.mulf %142, %145 : vector<8x1xf32>
      %c0_90 = arith.constant 0 : index
      %c0_91 = arith.constant 0 : index
      %147 = vector.load %arg13[%c0_90, %c0_91] : memref<8x32xf32, #tpu.memory_space<vmem>>, vector<8x8xf32>
      %148 = vector.broadcast %146 : vector<8x1xf32> to vector<8x8xf32>
      %149 = arith.mulf %147, %148 : vector<8x8xf32>
      %c0_92 = arith.constant 0 : index
      %c0_93 = arith.constant 0 : index
      %150 = vector.load %arg13[%c0_92, %c0_93] : memref<8x32xf32, #tpu.memory_space<vmem>>, vector<8x8xf32>
      tpu.vector_store %arg13[%c0_92, %c0_93], %149 {strides = array<i32>} : memref<8x32xf32, #tpu.memory_space<vmem>>, vector<8x8xf32>,
      %c1_94 = arith.constant 1 : index
      %c0_95 = arith.constant 0 : index
      %c0_96 = arith.constant 0 : index
      %151 = vector.load %arg12[%c1_94, %c0_95, %c0_96] : memref<4x8x1xf32, #tpu.memory_space<vmem>>, vector<1x8x1xf32>
      %152 = vector.shape_cast %151 : vector<1x8x1xf32> to vector<8x1xf32>
      %153 = tpu.reciprocal %152 {approx = true} : vector<8x1xf32> -> vector<8x1xf32>
      %154 = arith.mulf %152, %153 : vector<8x1xf32>
      %cst_97 = arith.constant 2.000000e+00 : f32
      %155 = vector.broadcast %cst_97 : f32 to vector<8x1xf32>
      %156 = arith.subf %155, %154 : vector<8x1xf32>
      %157 = arith.mulf %153, %156 : vector<8x1xf32>
      %c0_98 = arith.constant 0 : index
      %c8_99 = arith.constant 8 : index
      %158 = vector.load %arg13[%c0_98, %c8_99] : memref<8x32xf32, #tpu.memory_space<vmem>>, vector<8x8xf32>
      %159 = vector.broadcast %157 : vector<8x1xf32> to vector<8x8xf32>
      %160 = arith.mulf %158, %159 : vector<8x8xf32>
      %c0_100 = arith.constant 0 : index
      %c8_101 = arith.constant 8 : index
      %161 = vector.load %arg13[%c0_100, %c8_101] : memref<8x32xf32, #tpu.memory_space<vmem>>, vector<8x8xf32>
      tpu.vector_store %arg13[%c0_100, %c8_101], %160 {strides = array<i32>} : memref<8x32xf32, #tpu.memory_space<vmem>>, vector<8x8xf32>,
      %c2_102 = arith.constant 2 : index
      %c0_103 = arith.constant 0 : index
      %c0_104 = arith.constant 0 : index
      %162 = vector.load %arg12[%c2_102, %c0_103, %c0_104] : memref<4x8x1xf32, #tpu.memory_space<vmem>>, vector<1x8x1xf32>
      %163 = vector.shape_cast %162 : vector<1x8x1xf32> to vector<8x1xf32>
      %164 = tpu.reciprocal %163 {approx = true} : vector<8x1xf32> -> vector<8x1xf32>
      %165 = arith.mulf %163, %164 : vector<8x1xf32>
      %cst_105 = arith.constant 2.000000e+00 : f32
      %166 = vector.broadcast %cst_105 : f32 to vector<8x1xf32>
      %167 = arith.subf %166, %165 : vector<8x1xf32>
      %168 = arith.mulf %164, %167 : vector<8x1xf32>
      %c0_106 = arith.constant 0 : index
      %c16_107 = arith.constant 16 : index
      %169 = vector.load %arg13[%c0_106, %c16_107] : memref<8x32xf32, #tpu.memory_space<vmem>>, vector<8x8xf32>
      %170 = vector.broadcast %168 : vector<8x1xf32> to vector<8x8xf32>
      %171 = arith.mulf %169, %170 : vector<8x8xf32>
      %c0_108 = arith.constant 0 : index
      %c16_109 = arith.constant 16 : index
      %172 = vector.load %arg13[%c0_108, %c16_109] : memref<8x32xf32, #tpu.memory_space<vmem>>, vector<8x8xf32>
      tpu.vector_store %arg13[%c0_108, %c16_109], %171 {strides = array<i32>} : memref<8x32xf32, #tpu.memory_space<vmem>>, vector<8x8xf32>,
      %c3_110 = arith.constant 3 : index
      %c0_111 = arith.constant 0 : index
      %c0_112 = arith.constant 0 : index
      %173 = vector.load %arg12[%c3_110, %c0_111, %c0_112] : memref<4x8x1xf32, #tpu.memory_space<vmem>>, vector<1x8x1xf32>
      %174 = vector.shape_cast %173 : vector<1x8x1xf32> to vector<8x1xf32>
      %175 = tpu.reciprocal %174 {approx = true} : vector<8x1xf32> -> vector<8x1xf32>
      %176 = arith.mulf %174, %175 : vector<8x1xf32>
      %cst_113 = arith.constant 2.000000e+00 : f32
      %177 = vector.broadcast %cst_113 : f32 to vector<8x1xf32>
      %178 = arith.subf %177, %176 : vector<8x1xf32>
      %179 = arith.mulf %175, %178 : vector<8x1xf32>
      %c0_114 = arith.constant 0 : index
      %c24_115 = arith.constant 24 : index
      %180 = vector.load %arg13[%c0_114, %c24_115] : memref<8x32xf32, #tpu.memory_space<vmem>>, vector<8x8xf32>
      %181 = vector.broadcast %179 : vector<8x1xf32> to vector<8x8xf32>
      %182 = arith.mulf %180, %181 : vector<8x8xf32>
      %c0_116 = arith.constant 0 : index
      %c24_117 = arith.constant 24 : index
      %183 = vector.load %arg13[%c0_116, %c24_117] : memref<8x32xf32, #tpu.memory_space<vmem>>, vector<8x8xf32>
      tpu.vector_store %arg13[%c0_116, %c24_117], %182 {strides = array<i32>} : memref<8x32xf32, #tpu.memory_space<vmem>>, vector<8x8xf32>,
      %c0_118 = arith.constant 0 : index
      %c0_119 = arith.constant 0 : index
      %184 = vector.load %arg13[%c0_118, %c0_119] : memref<8x32xf32, #tpu.memory_space<vmem>>, vector<8x32xf32>
      %185 = arith.truncf %184 : vector<8x32xf32> to vector<8x32xbf16>
      %c0_120 = arith.constant 0 : index
      %c0_121 = arith.constant 0 : index
      %186 = vector.load %arg7[%c0_120, %c0_121] : memref<32x32xbf16, #tpu.memory_space<vmem>>, vector<32x32xbf16>
      %cst_122 = arith.constant dense<0.000000e+00> : vector<8x32xf32>
      %187 = tpu.matmul %185, %186, %cst_122 {dimension_numbers = #tpu.dot_dimension_numbers<[1], [0], [0], [1], [0, 0, 1, 1], [], []>} : vector<8x32xbf16>, vector<32x32xbf16>, vector<8x32xf32> -> vector<8x32xf32>
      %c0_123 = arith.constant 0 : index
      %c0_124 = arith.constant 0 : index
      %188 = vector.load %arg8[%c0_123, %c0_124] : memref<1x32xf32, #tpu.memory_space<vmem>>, vector<1x32xf32>
      %189 = vector.broadcast %188 : vector<1x32xf32> to vector<8x32xf32>
      %190 = arith.addf %187, %189 : vector<8x32xf32>
      %c0_125 = arith.constant 0 : index
      %c0_126 = arith.constant 0 : index
      %c0_127 = arith.constant 0 : index
      %191 = vector.load %arg9[%c0_125, %c0_126, %c0_127] : memref<1x8x32xf32, #tpu.memory_space<vmem>>, vector<1x8x32xf32>
      %192 = vector.shape_cast %191 : vector<1x8x32xf32> to vector<8x32xf32>
      %193 = vector.shape_cast %190 : vector<8x32xf32> to vector<1x8x32xf32>
      tpu.vector_store %arg9[%c0_125, %c0_126, %c0_127], %193 {strides = array<i32>} : memref<1x8x32xf32, #tpu.memory_space<vmem>>, vector<1x8x32xf32>,
    } else {
    }
    return
  }
  func.func @transform_0(%arg0: i32, %arg1: i32, %arg2: i32) -> (i32, i32, i32) {
    %c0_i32 = arith.constant 0 : i32
    %c0_i32_0 = arith.constant 0 : i32
    return %arg0, %arg1, %c0_i32 : i32, i32, i32
  }
  func.func @transform_1(%arg0: i32, %arg1: i32, %arg2: i32) -> (i32, i32, i32) {
    %c0_i32 = arith.constant 0 : i32
    %c0_i32_0 = arith.constant 0 : i32
    return %arg0, %arg2, %c0_i32 : i32, i32, i32
  }
  func.func @transform_2(%arg0: i32, %arg1: i32, %arg2: i32) -> (i32, i32) {
    %c0_i32 = arith.constant 0 : i32
    %c0_i32_0 = arith.constant 0 : i32
    %c0_i32_1 = arith.constant 0 : i32
    return %c0_i32, %c0_i32_0 : i32, i32
  }
  func.func @transform_3(%arg0: i32, %arg1: i32, %arg2: i32) -> (i32, i32) {
    %c0_i32 = arith.constant 0 : i32
    %c0_i32_0 = arith.constant 0 : i32
    %c0_i32_1 = arith.constant 0 : i32
    return %c0_i32, %c0_i32_0 : i32, i32
  }
  func.func @transform_4(%arg0: i32, %arg1: i32, %arg2: i32) -> (i32, i32) {
    %c0_i32 = arith.constant 0 : i32
    %c0_i32_0 = arith.constant 0 : i32
    %c0_i32_1 = arith.constant 0 : i32
    return %c0_i32, %c0_i32_0 : i32, i32
  }
  func.func @transform_5(%arg0: i32, %arg1: i32, %arg2: i32) -> (i32, i32) {
    %c0_i32 = arith.constant 0 : i32
    %c0_i32_0 = arith.constant 0 : i32
    %c0_i32_1 = arith.constant 0 : i32
    return %c0_i32, %c0_i32_0 : i32, i32
  }
  func.func @transform_6(%arg0: i32, %arg1: i32, %arg2: i32) -> (i32, i32, i32) {
    %c0_i32 = arith.constant 0 : i32
    %c0_i32_0 = arith.constant 0 : i32
    return %arg0, %arg1, %c0_i32 : i32, i32, i32
  }
}

</mosaic_0001>

<llo_original>
// kernel: cross_attention.2
$region0: #{cross_attention.2}
  #allocation0 [shape = 'u32[]', space=smem, size = 0x4, offset = 0x4, fixed_abs, tag = 'smem constant byte address 0x4 - core index']
  #allocation1 [shape = 'u32[144,128]{1,0:T(1,128)}', space=vmem, size = 0x12000, scoped, tag = 'internal scratch']
  #allocation2 [shape = 'f32[32,64]{1,0:T(8,128)}', space=vmem, size = 0x4000, scoped, tag = 'scratch operand']
  %s0 = inlined_call_operand.hbm [shape: f32[32,24], index: 0, kind: input, shape index: {}]
  %s1 = inlined_call_operand.vmem [shape: bf16[24,64], index: 1, kind: input, shape index: {}]
  %s2 = inlined_call_operand.vmem [shape: f32[1,64], index: 2, kind: input, shape index: {}]
  %s3 = inlined_call_operand.vmem [shape: bf16[32,64], index: 3, kind: output, shape index: {}]
  %s4 = sld [smem:[#allocation0]]
  $region34: #{cross_attention.2} parent=0
    _
  %s6 = ssub.s32 1, %s4
  %s7 = scalar_select 0, %s6, %s4
  $region1: #{cross_attention.2} parent=0
    #allocation3 [shape = 'u8[16384]{0}', space=vmem, size = 0x4000, scoped, tag = 'input window, operand 0, single buffered']
    #allocation4 [shape = 's32[1]{0}', space=sflag, size = 0x4, scoped, tag = 'scoped memory for cross_attention.2']
    %8 = vsyncpa [#allocation4], 0
    // Predicated region
    $region2: #{cross_attention.2} parent=1 // pred_check
      _
    $region3: #{cross_attention.2} parent=1 // pred_check_branch
      %10 = sbr.rel (0) target = $region5
    $region4: #{cross_attention.2} parent=1 // pred_region
      %s12 = ssub.s32 512, 512
      %13 = vsyncadd [#allocation4], %s12
      %s14 = sshll.u32 [#allocation3], 4
      %s15 = int_to_ptr.vmem [resolvable:$true] %s14
      %20 = dma.hbm_to_vmem [thread:$0]  %s0, 512, %s15, [#allocation4], 128, 128, 8
    $region5: #{cross_attention.2} parent=1 // pred_fallthru
      _
    // Predicated region
    $region6: #{cross_attention.2} parent=1 // pred_check
      _
    $region7: #{cross_attention.2} parent=1 // pred_check_branch
      %22 = sbr.rel (0) target = $region9
    $region8: #{cross_attention.2} parent=1 // pred_region
      _
    $region9: #{cross_attention.2} parent=1 // pred_fallthru
      _
    // Predicated region
    $region10: #{cross_attention.2} parent=1 // pred_check
      _
    $region11: #{cross_attention.2} parent=1 // pred_check_branch
      %24 = sbr.rel (0) target = $region13
    $region12: #{cross_attention.2} parent=1 // pred_region
      _
    $region13: #{cross_attention.2} parent=1 // pred_fallthru
      _
    // Predicated region
    $region14: #{cross_attention.2} parent=1 // pred_check
      _
    $region15: #{cross_attention.2} parent=1 // pred_check_branch
      %26 = sbr.rel (0) target = $region17
    $region16: #{cross_attention.2} parent=1 // pred_region
      %27 = dma.done [#allocation4], 512
    $region17: #{cross_attention.2} parent=1 // pred_fallthru
      _
    %p29 = scmp.eq.s32.totalorder 0, 0
    // Predicated region
    $region18: #{cross_attention.2} parent=1 // pred_check
      %p30 = pneg %p29
    $region19: #{cross_attention.2} parent=1 // pred_check_branch
      %32 = sbr.rel (%p30) target = $region21
    $region20: #{cross_attention.2} parent=1 // pred_region
      %vm33 = vcmask 523264
      %34 = vst.msk [vmem:[#allocation2] sm:$0xff] %vm33, 0.0
      %35 = vst.msk [vmem:[#allocation2 + $0x8] sm:$0xff] %vm33, 0.0
      %36 = vst.msk [vmem:[#allocation2 + $0x10] sm:$0xff] %vm33, 0.0
      %37 = vst.msk [vmem:[#allocation2 + $0x18] sm:$0xff] %vm33, 0.0
    $region21: #{cross_attention.2} parent=1 // pred_fallthru
      _
    %v38 = vld [vmem:[#allocation2] sm:$0xff]
    %v39 = vld [vmem:[#allocation2 + $0x8] sm:$0xff]
    %v40 = vld [vmem:[#allocation2 + $0x10] sm:$0xff]
    %v41 = vld [vmem:[#allocation2 + $0x18] sm:$0xff]
    %v42 = vld [vmem:[#allocation3] sm:$0xff]
    %v43 = vld [vmem:[#allocation3 + $0x8] sm:$0xff]
    %v44 = vld [vmem:[#allocation3 + $0x10] sm:$0xff]
    %v45 = vld [vmem:[#allocation3 + $0x18] sm:$0xff]
    %v46 = vpack.c.bf16 %v43, %v42
    %v47 = vpack.c.bf16 %v45, %v44
    %v48 = vld [vmem:[%s1] sm:$0xf]
    %v49 = vld [vmem:[%s1 + $0x4] sm:$0xf]
    %v50 = vld [vmem:[%s1 + $0x8] sm:$0xf]
    %v54 = vunpack.c.l.b16 %v48
    %v55 = vunpack.c.l.b16 %v49
    %v56 = vunpack.c.l.b16 %v50
    %v57 = vpack.c.b16 %v55, %v54
    %v58 = vpack.c.b16 %v56, %v56
    %vm60 = vcmask 195584
    %v62 = vsel %vm60, %v46, 0
    %v65 = vsel %vm60, %v47, 0
    %vm67 = vcmask 1043456
    %v69 = vsel %vm67, %v58, 0
    %71 = vmatprep.subr.bf16.mxu0 0
    %72 = vmatpush1.bf16.msra.mxu0 %v57
    %73 = vmatprep.subr.bf16.mxu0 0
    %74 = vmatpush1.bf16.msra.mxu0 %v69
    %75 = vmatprep.subr.bf16.mxu0 0
    %76 = vmatpush1.bf16.msra.mxu0 0
    %77 = vmatprep.subr.bf16.mxu0 0
    %78 = vmatpush1.bf16.msra.mxu0 0
    %79 = vmatprep.subr.bf16.mxu0 0
    %80 = vmatpush1.bf16.msra.mxu0 0
    %81 = vmatprep.subr.bf16.mxu0 0
    %82 = vmatpush1.bf16.msra.mxu0 0
    %83 = vmatprep.subr.bf16.mxu0 0
    %84 = vmatpush1.bf16.msra.mxu0 0
    %85 = vmatprep.subr.bf16.mxu0 0
    %86 = vmatpush1.bf16.msra.mxu0 0
    %87 = vmatprep.subr.bf16.mxu0 0
    %88 = vmatpush1.bf16.msra.mxu0 0
    %89 = vmatprep.subr.bf16.mxu0 0
    %90 = vmatpush1.bf16.msra.mxu0 0
    %91 = vmatprep.subr.bf16.mxu0 0
    %92 = vmatpush1.bf16.msra.mxu0 0
    %93 = vmatprep.subr.bf16.mxu0 0
    %94 = vmatpush1.bf16.msra.mxu0 0
    %95 = vmatprep.subr.bf16.mxu0 0
    %96 = vmatpush1.bf16.msra.mxu0 0
    %97 = vmatprep.subr.bf16.mxu0 0
    %98 = vmatpush1.bf16.msra.mxu0 0
    %99 = vmatprep.subr.bf16.mxu0 0
    %100 = vmatpush1.bf16.msra.mxu0 0
    %101 = vmatprep.subr.bf16.mxu0 0
    %102 = vmatpush1.bf16.msra.mxu0 0
    %103 = vmatprep.mubr.bf16.mxu0 0
    %104 = vmatmul.mubr.bf16.gmra.mrb[0].mxu0 %v62
    %v105 = vpop.f32.mrb[0].mxu0
    %v106 = vadd.f32 0.0, %v105
    %v107 = vpop.f32.mrb[0].mxu0
    %v108 = vpop.f32.mrb[0].mxu0
    %v109 = vadd.f32 0.0, %v108
    %v110 = vpop.f32.mrb[0].mxu0
    %111 = vmatprep.mubr.bf16.mxu0 0
    %112 = vmatmul.mubr.bf16.gmra.mrb[0].mxu0 %v65
    %v113 = vpop.f32.mrb[0].mxu0
    %v114 = vadd.f32 0.0, %v113
    %v115 = vpop.f32.mrb[0].mxu0
    %v116 = vpop.f32.mrb[0].mxu0
    %v117 = vadd.f32 0.0, %v116
    %v118 = vpop.f32.mrb[0].mxu0
    %119 = vdwg.mxu0
    %v120 = vadd.f32 %v38, %v106
    %v121 = vadd.f32 %v39, %v109
    %v122 = vadd.f32 %v40, %v114
    %v123 = vadd.f32 %v41, %v117
    %vm124 = vcmask 523264
    %125 = vst.msk [vmem:[#allocation2] sm:$0xff] %vm124, %v120
    %126 = vst.msk [vmem:[#allocation2 + $0x8] sm:$0xff] %vm124, %v121
    %127 = vst.msk [vmem:[#allocation2 + $0x10] sm:$0xff] %vm124, %v122
    %128 = vst.msk [vmem:[#allocation2 + $0x18] sm:$0xff] %vm124, %v123
    // Predicated region
    $region22: #{cross_attention.2} parent=1 // pred_check
      %p129 = pneg %p29
    $region23: #{cross_attention.2} parent=1 // pred_check_branch
      %131 = sbr.rel (%p129) target = $region25
    $region24: #{cross_attention.2} parent=1 // pred_region
      %v132 = vld [vmem:[#allocation2] sm:$0xff]
      %v133 = vld [vmem:[#allocation2 + $0x8] sm:$0xff]
      %v134 = vld [vmem:[#allocation2 + $0x10] sm:$0xff]
      %v135 = vld [vmem:[#allocation2 + $0x18] sm:$0xff]
      %v136 = vld [vmem:[%s2] sm:$0x1]
      %v138 = vlaneseq
      %v139 = vshrl.u32 %v138, 7
      %v140 = vsub.s32 0, %v139
      %v141 = vrot.slane %v136, %v140
      %v143 = vadd.f32 %v132, %v141
      %v144 = vadd.f32 %v133, %v141
      %v145 = vadd.f32 %v134, %v141
      %v146 = vadd.f32 %v135, %v141
      %v147 = vpack.c.bf16 %v144, %v143
      %v148 = vpack.c.bf16 %v146, %v145
      %v151 = vunpack.c.l.b16 %v147
      %v152 = vunpack.c.h.b16 %v147
      %v153 = vunpack.c.l.b16 %v148
      %v154 = vunpack.c.h.b16 %v148
      %v155 = vpack.c.b16 %v151, %v151
      %v156 = vpack.c.b16 %v152, %v152
      %v157 = vpack.c.b16 %v153, %v153
      %v158 = vpack.c.b16 %v154, %v154
      %vm163 = vcmask 519168
      %164 = vst.msk [vmem:[%s3] sm:$0xf] %vm163, %v155
      %165 = vst.msk [vmem:[%s3 + $0x4] sm:$0xf] %vm163, %v156
      %166 = vst.msk [vmem:[%s3 + $0x8] sm:$0xf] %vm163, %v157
      %167 = vst.msk [vmem:[%s3 + $0xc] sm:$0xf] %vm163, %v158
    $region25: #{cross_attention.2} parent=1 // pred_fallthru
      _
    // Predicated region
    $region26: #{cross_attention.2} parent=1 // pred_check
      _
    $region27: #{cross_attention.2} parent=1 // pred_check_branch
      %169 = sbr.rel (0) target = $region29
    $region28: #{cross_attention.2} parent=1 // pred_region
      _
    $region29: #{cross_attention.2} parent=1 // pred_fallthru
      _
    // Predicated region
    $region30: #{cross_attention.2} parent=1 // pred_check
      _
    $region31: #{cross_attention.2} parent=1 // pred_check_branch
      %171 = sbr.rel (0) target = $region33
    $region32: #{cross_attention.2} parent=1 // pred_region
      _
    $region33: #{cross_attention.2} parent=1 // pred_fallthru
      _
    %172 = vsyncpa [#allocation4], 1

// kernel: cross_attention.3
$region0: #{cross_attention.3}
  #allocation0 [shape = 'u32[]', space=smem, size = 0x4, offset = 0x4, fixed_abs, tag = 'smem constant byte address 0x4 - core index']
  #allocation1 [shape = 'u32[144,128]{1,0:T(1,128)}', space=vmem, size = 0x12000, scoped, tag = 'internal scratch']
  #allocation2 [shape = 'bf16[8,32]{1,0:T(8,128)(2,1)}', space=vmem, size = 0x800, scoped, tag = 'scratch operand']
  #allocation3 [shape = 'f32[4,8,1]{2,1,0:T(8,128)}', space=vmem, size = 0x4000, scoped, tag = 'scratch operand']
  #allocation4 [shape = 'f32[4,8,1]{2,1,0:T(8,128)}', space=vmem, size = 0x4000, scoped, tag = 'scratch operand']
  #allocation5 [shape = 'f32[8,32]{1,0:T(8,128)}', space=vmem, size = 0x1000, scoped, tag = 'scratch operand']
  %s0 = inlined_call_operand.vmem [shape: f32[2,8,32], index: 0, kind: input, shape index: {}]
  %s1 = inlined_call_operand.vmem [shape: bf16[2,16,64], index: 1, kind: input, shape index: {}]
  %s2 = inlined_call_operand.vmem [shape: bf16[32,32], index: 2, kind: input, shape index: {}]
  %s3 = inlined_call_operand.vmem [shape: f32[1,32], index: 3, kind: input, shape index: {}]
  %s4 = inlined_call_operand.vmem [shape: bf16[32,32], index: 4, kind: input, shape index: {}]
  %s5 = inlined_call_operand.vmem [shape: f32[1,32], index: 5, kind: input, shape index: {}]
  %s6 = inlined_call_operand.hbm [shape: f32[2,8,32], index: 6, kind: output, shape index: {}]
  %s7 = sld [smem:[#allocation0]]
  $region65: #{cross_attention.3} parent=0
    _
  %s9 = ssub.s32 1, %s7
  %s10 = scalar_select 0, %s9, %s7
  $region1: #{cross_attention.3} parent=0
    #allocation6 [shape = 'u8[8192]{0}', space=vmem, size = 0x2000, scoped, tag = 'output window, operand 0']
    #allocation7 [shape = 's32[2]{0}', space=sflag, size = 0x8, scoped, tag = 'scoped memory for cross_attention.3']
    %11 = vsyncpa [#allocation7], 0
    %s12 = scalar_lea.sflag [#allocation7], 1
    %13 = vsyncpa %s12, 0
    loop: start=0, step=1, limit=4
    $region2: #{cross_attention.3} parent=1 // loop_pre_header
      _
    $region3: #{cross_attention.3} parent=1 // loop_header
      %s15 = sphi 0, %s19
      %p16 = scmp.ge.s32.totalorder %s15, 4
      %s22 = sphi 0, %s41
      %s23 = sphi 0, %s37
      %s24 = sphi 0, %s33
      %s25 = sphi 0, %s22
      %s26 = sphi 0, %s23
      %s27 = sphi 0, %s24
      %s28 = sphi 0, %s25
      %s29 = sphi 0, %s26
      %s30 = sphi 0, %s27
      %s46 = sphi 0, %s48
      %s49 = sphi 0, %s46
      %s50 = sphi 0, %s49
      %s66 = sphi 0, %s50
      %s74 = sphi 0, %s76
      %s77 = sphi 0, %s74
      %s78 = sphi 0, %s77
      %s94 = sphi 0, %s78
      %s98 = sphi 0, %s98
      %s100 = sphi 0, %s98
      %s101 = sphi 0, %s100
      %s115 = sphi 0, %s101
      %s119 = sphi 0, %s119
      %s121 = sphi 0, %s119
      %s122 = sphi 0, %s121
      %s136 = sphi 0, %s122
      %s140 = sphi 0, %s140
      %s142 = sphi 0, %s140
      %s143 = sphi 0, %s142
      %s157 = sphi 0, %s143
      %s161 = sphi 0, %s161
      %s163 = sphi 0, %s161
      %s164 = sphi 0, %s163
      %s178 = sphi 0, %s164
      %s186 = sphi 0, %s188
      %s189 = sphi 0, %s186
      %s190 = sphi 0, %s189
      %s206 = sphi 0, %s190
    $region4: #{cross_attention.3} parent=1 // loop_header_branch
      %18 = sbr.rel (%p16) target = $region8
    $region5: #{cross_attention.3} parent=1 // loop_body
      %s20 = ssub.s32 %s15, 1
      %s21 = ssub.s32 %s15, 2
      %s31 = sadd.s32 1, %s24
      %p32 = scmp.ge.s32.totalorder %s31, 1
      %s33 = scalar_select %p32, 0, %s31
      %s34 = sadd.s32 1, %s23
      %s35 = scalar_select %p32, %s34, %s23
      %p36 = scmp.ge.s32.totalorder %s35, 1
      %s37 = scalar_select %p36, 0, %s35
      %s38 = sadd.s32 1, %s22
      %s39 = scalar_select %p36, %s38, %s22
      %p40 = scmp.ge.s32.totalorder %s39, 2
      %s41 = scalar_select %p40, 0, %s39
      %s42 = ssub.s32 %s22, %s41
      %s43 = ssub.s32 %s23, %s37
      %s44 = sor.u32 %s42, %s43
      %p45 = scmp.eq.s32.totalorder %s44, 0
      %s47 = sadd.s32 %s46, 1
      %s48 = scalar_select %p45, %s46, %s47
      %p51 = pneg %p45
      %p52 = scmp.eq.s32.totalorder %s15, 1
      %p53 = por %p51, %p52
      %p54 = scmp.ne.s32.totalorder %s46, %s49
      %p55 = scmp.eq.s32.totalorder %s15, 0
      %p56 = por %p54, %p55
      %p57 = scmp.ne.s32.totalorder %s46, %s49
      %p58 = scmp.eq.s32.totalorder %s20, 1
      %p59 = por %p57, %p58
      %p60 = scmp.ne.s32.totalorder %s49, %s50
      %p61 = scmp.eq.s32.totalorder %s20, 0
      %p62 = por %p60, %p61
      %p63 = scmp.ne.s32.totalorder %s49, %s50
      %p64 = scmp.eq.s32.totalorder %s21, 1
      %p65 = por %p63, %p64
      %p67 = scmp.ne.s32.totalorder %s50, %s66
      %p68 = scmp.eq.s32.totalorder %s21, 0
      %p69 = por %p67, %p68
      %s70 = ssub.s32 %s22, %s41
      %s71 = ssub.s32 %s24, %s33
      %s72 = sor.u32 %s70, %s71
      %p73 = scmp.eq.s32.totalorder %s72, 0
      %s75 = sadd.s32 %s74, 1
      %s76 = scalar_select %p73, %s74, %s75
      %p79 = pneg %p73
      %p80 = scmp.eq.s32.totalorder %s15, 1
      %p81 = por %p79, %p80
      %p82 = scmp.ne.s32.totalorder %s74, %s77
      %p83 = scmp.eq.s32.totalorder %s15, 0
      %p84 = por %p82, %p83
      %p85 = scmp.ne.s32.totalorder %s74, %s77
      %p86 = scmp.eq.s32.totalorder %s20, 1
      %p87 = por %p85, %p86
      %p88 = scmp.ne.s32.totalorder %s77, %s78
      %p89 = scmp.eq.s32.totalorder %s20, 0
      %p90 = por %p88, %p89
      %p91 = scmp.ne.s32.totalorder %s77, %s78
      %p92 = scmp.eq.s32.totalorder %s21, 1
      %p93 = por %p91, %p92
      %p95 = scmp.ne.s32.totalorder %s78, %s94
      %p96 = scmp.eq.s32.totalorder %s21, 0
      %p97 = por %p95, %p96
      %s99 = sadd.s32 %s98, 1
      %p102 = scmp.eq.s32.totalorder %s15, 1
      %p103 = scmp.ne.s32.totalorder %s98, %s100
      %p104 = scmp.eq.s32.totalorder %s15, 0
      %p105 = por %p103, %p104
      %p106 = scmp.ne.s32.totalorder %s98, %s100
      %p107 = scmp.eq.s32.totalorder %s20, 1
      %p108 = por %p106, %p107
      %p109 = scmp.ne.s32.totalorder %s100, %s101
      %p110 = scmp.eq.s32.totalorder %s20, 0
      %p111 = por %p109, %p110
      %p112 = scmp.ne.s32.totalorder %s100, %s101
      %p113 = scmp.eq.s32.totalorder %s21, 1
      %p114 = por %p112, %p113
      %p116 = scmp.ne.s32.totalorder %s101, %s115
      %p117 = scmp.eq.s32.totalorder %s21, 0
      %p118 = por %p116, %p117
      %s120 = sadd.s32 %s119, 1
      %p123 = scmp.eq.s32.totalorder %s15, 1
      %p124 = scmp.ne.s32.totalorder %s119, %s121
      %p125 = scmp.eq.s32.totalorder %s15, 0
      %p126 = por %p124, %p125
      %p127 = scmp.ne.s32.totalorder %s119, %s121
      %p128 = scmp.eq.s32.totalorder %s20, 1
      %p129 = por %p127, %p128
      %p130 = scmp.ne.s32.totalorder %s121, %s122
      %p131 = scmp.eq.s32.totalorder %s20, 0
      %p132 = por %p130, %p131
      %p133 = scmp.ne.s32.totalorder %s121, %s122
      %p134 = scmp.eq.s32.totalorder %s21, 1
      %p135 = por %p133, %p134
      %p137 = scmp.ne.s32.totalorder %s122, %s136
      %p138 = scmp.eq.s32.totalorder %s21, 0
      %p139 = por %p137, %p138
      %s141 = sadd.s32 %s140, 1
      %p144 = scmp.eq.s32.totalorder %s15, 1
      %p145 = scmp.ne.s32.totalorder %s140, %s142
      %p146 = scmp.eq.s32.totalorder %s15, 0
      %p147 = por %p145, %p146
      %p148 = scmp.ne.s32.totalorder %s140, %s142
      %p149 = scmp.eq.s32.totalorder %s20, 1
      %p150 = por %p148, %p149
      %p151 = scmp.ne.s32.totalorder %s142, %s143
      %p152 = scmp.eq.s32.totalorder %s20, 0
      %p153 = por %p151, %p152
      %p154 = scmp.ne.s32.totalorder %s142, %s143
      %p155 = scmp.eq.s32.totalorder %s21, 1
      %p156 = por %p154, %p155
      %p158 = scmp.ne.s32.totalorder %s143, %s157
      %p159 = scmp.eq.s32.totalorder %s21, 0
      %p160 = por %p158, %p159
      %s162 = sadd.s32 %s161, 1
      %p165 = scmp.eq.s32.totalorder %s15, 1
      %p166 = scmp.ne.s32.totalorder %s161, %s163
      %p167 = scmp.eq.s32.totalorder %s15, 0
      %p168 = por %p166, %p167
      %p169 = scmp.ne.s32.totalorder %s161, %s163
      %p170 = scmp.eq.s32.totalorder %s20, 1
      %p171 = por %p169, %p170
      %p172 = scmp.ne.s32.totalorder %s163, %s164
      %p173 = scmp.eq.s32.totalorder %s20, 0
      %p174 = por %p172, %p173
      %p175 = scmp.ne.s32.totalorder %s163, %s164
      %p176 = scmp.eq.s32.totalorder %s21, 1
      %p177 = por %p175, %p176
      %p179 = scmp.ne.s32.totalorder %s164, %s178
      %p180 = scmp.eq.s32.totalorder %s21, 0
      %p181 = por %p179, %p180
      %s182 = ssub.s32 %s22, %s41
      %s183 = ssub.s32 %s23, %s37
      %s184 = sor.u32 %s182, %s183
      %p185 = scmp.eq.s32.totalorder %s184, 0
      %s187 = sadd.s32 %s186, 1
      %s188 = scalar_select %p185, %s186, %s187
      %p191 = pneg %p185
      %p192 = scmp.eq.s32.totalorder %s15, 1
      %p193 = por %p191, %p192
      %p194 = scmp.ne.s32.totalorder %s186, %s189
      %p195 = scmp.eq.s32.totalorder %s15, 0
      %p196 = por %p194, %p195
      %p197 = scmp.ne.s32.totalorder %s186, %s189
      %p198 = scmp.eq.s32.totalorder %s20, 1
      %p199 = por %p197, %p198
      %p200 = scmp.ne.s32.totalorder %s189, %s190
      %p201 = scmp.eq.s32.totalorder %s20, 0
      %p202 = por %p200, %p201
      %p203 = scmp.ne.s32.totalorder %s189, %s190
      %p204 = scmp.eq.s32.totalorder %s21, 1
      %p205 = por %p203, %p204
      %p207 = scmp.ne.s32.totalorder %s190, %s206
      %p208 = scmp.eq.s32.totalorder %s21, 0
      %p209 = por %p207, %p208
      %p210 = scmp.le.s32.totalorder 1, %s15
      %p211 = scmp.lt.s32.totalorder %s15, 3
      %p212 = pnand %p210, %p211
      %p213 = pneg %p212
      // Predicated region
      $region9: #{cross_attention.3} parent=5 // pred_check
        _
      $region10: #{cross_attention.3} parent=5 // pred_check_branch
        %215 = sbr.rel (%p212) target = $region12
      $region11: #{cross_attention.3} parent=5 // pred_region
        %s216 = ssub.s32 %s15, 1
        // Predicated region
        $region13: #{cross_attention.3} parent=11 // pred_check
          %p217 = pneg %p111
        $region14: #{cross_attention.3} parent=11 // pred_check_branch
          %219 = sbr.rel (%p217) target = $region16
        $region15: #{cross_attention.3} parent=11 // pred_region
          _
        $region16: #{cross_attention.3} parent=11 // pred_fallthru
          _
        // Predicated region
        $region17: #{cross_attention.3} parent=11 // pred_check
          %p220 = pneg %p132
        $region18: #{cross_attention.3} parent=11 // pred_check_branch
          %222 = sbr.rel (%p220) target = $region20
        $region19: #{cross_attention.3} parent=11 // pred_region
          _
        $region20: #{cross_attention.3} parent=11 // pred_fallthru
          _
        // Predicated region
        $region21: #{cross_attention.3} parent=11 // pred_check
          %p223 = pneg %p153
        $region22: #{cross_attention.3} parent=11 // pred_check_branch
          %225 = sbr.rel (%p223) target = $region24
        $region23: #{cross_attention.3} parent=11 // pred_region
          _
        $region24: #{cross_attention.3} parent=11 // pred_fallthru
          _
        // Predicated region
        $region25: #{cross_attention.3} parent=11 // pred_check
          %p226 = pneg %p174
        $region26: #{cross_attention.3} parent=11 // pred_check_branch
          %228 = sbr.rel (%p226) target = $region28
        $region27: #{cross_attention.3} parent=11 // pred_region
          _
        $region28: #{cross_attention.3} parent=11 // pred_fallthru
          _
      $region12: #{cross_attention.3} parent=5 // pred_fallthru
        _
      %p229 = scmp.lt.s32.totalorder %s15, 2
      // Predicated region
      $region29: #{cross_attention.3} parent=5 // pred_check
        %p230 = pneg %p229
      $region30: #{cross_attention.3} parent=5 // pred_check_branch
        %232 = sbr.rel (%p230) target = $region32
      $region31: #{cross_attention.3} parent=5 // pred_region
        // Predicated region
        $region33: #{cross_attention.3} parent=31 // pred_check
          %p233 = pneg %p56
        $region34: #{cross_attention.3} parent=31 // pred_check_branch
          %235 = sbr.rel (%p233) target = $region36
        $region35: #{cross_attention.3} parent=31 // pred_region
          %p236 = scmp.lt.s32.totalorder %s22, 1
          %s237 = scalar_select %p236, %s22, 1
          %p238 = scmp.lt.s32.totalorder %s23, 0
          %s239 = scalar_select %p238, %s23, 0
          %s240 = sadd.s32 %s239, %s237
          %s241 = smul.addr %s240, 8
          %s242 = scalar_lea.vmem %s0, %s241
        $region36: #{cross_attention.3} parent=31 // pred_fallthru
          _
        // Predicated region
        $region37: #{cross_attention.3} parent=31 // pred_check
          %p243 = pneg %p84
        $region38: #{cross_attention.3} parent=31 // pred_check_branch
          %245 = sbr.rel (%p243) target = $region40
        $region39: #{cross_attention.3} parent=31 // pred_region
          %s246 = smul.u32 2, %s24
          %p247 = scmp.lt.s32.totalorder %s22, 1
          %s248 = scalar_select %p247, %s22, 1
          %p249 = scmp.lt.s32.totalorder %s246, 1
          %s250 = scalar_select %p249, %s246, 1
          %s251 = smul.addr %s248, 2
          %s252 = sadd.s32 %s250, %s251
          %s253 = smul.addr %s252, 4
          %s254 = scalar_lea.vmem %s1, %s253
          %s255 = smul.u32 2, %s24
        $region40: #{cross_attention.3} parent=31 // pred_fallthru
          _
      $region32: #{cross_attention.3} parent=5 // pred_fallthru
        _
      %p256 = scmp.le.s32.totalorder 1, %s15
      %p257 = scmp.lt.s32.totalorder %s15, 3
      %p258 = pnand %p256, %p257
      %p259 = pneg %p258
      // Predicated region
      $region41: #{cross_attention.3} parent=5 // pred_check
        _
      $region42: #{cross_attention.3} parent=5 // pred_check_branch
        %261 = sbr.rel (%p258) target = $region44
      $region43: #{cross_attention.3} parent=5 // pred_region
        %s262 = ssub.s32 %s15, 1
        %p263 = scmp.lt.s32.totalorder %s25, 1
        %s264 = scalar_select %p263, %s25, 1
        %p265 = scmp.lt.s32.totalorder %s26, 0
        %s266 = scalar_select %p265, %s26, 0
        %s267 = sadd.s32 %s266, %s264
        %s268 = smul.addr %s267, 8
        %s269 = scalar_lea.vmem %s0, %s268
        %p270 = pneg %p62
        %p271 = pneg %p59
        %s272 = smul.u32 2, %s27
        %p273 = scmp.lt.s32.totalorder %s25, 1
        %s274 = scalar_select %p273, %s25, 1
        %p275 = scmp.lt.s32.totalorder %s272, 1
        %s276 = scalar_select %p275, %s272, 1
        %s277 = smul.addr %s274, 2
        %s278 = sadd.s32 %s276, %s277
        %s279 = smul.addr %s278, 4
        %s280 = scalar_lea.vmem %s1, %s279
        %p281 = pneg %p90
        %p282 = pneg %p87
        %p283 = pneg %p111
        %p284 = pneg %p108
        %p285 = pneg %p132
        %p286 = pneg %p129
        %p287 = pneg %p153
        %p288 = pneg %p150
        %p289 = pneg %p174
        %p290 = pneg %p171
        %p291 = pneg %p202
        %p292 = pneg %p199
        %s293 = sand.u32 %s189, 1
        %s294 = scalar_lea.sflag [#allocation7], %s293
        %s295 = sand.u32 %s189, 1
        %s296 = smul.addr %s295, 8
        %s297 = scalar_lea.vmem [#allocation6], %s296
        %p298 = scmp.lt.s32.totalorder %s25, 1
        %s299 = scalar_select %p298, %s25, 1
        %p300 = scmp.lt.s32.totalorder %s26, 0
        %s301 = scalar_select %p300, %s26, 0
        %s302 = sadd.s32 %s301, %s299
        %s303 = smul.addr %s302, 8
        %s304 = scalar_lea.vmem %s0, %s303
        %s305 = smul.u32 2, %s27
        %p306 = scmp.lt.s32.totalorder %s25, 1
        %s307 = scalar_select %p306, %s25, 1
        %p308 = scmp.lt.s32.totalorder %s305, 1
        %s309 = scalar_select %p308, %s305, 1
        %s310 = smul.addr %s307, 2
        %s311 = sadd.s32 %s309, %s310
        %s312 = smul.addr %s311, 4
        %s313 = scalar_lea.vmem %s1, %s312
        %s314 = smul.u32 2, %s27
        %p316 = scmp.eq.s32.totalorder %s27, 0
        // Predicated region
        $region45: #{cross_attention.3} parent=43 // pred_check
          %p317 = pneg %p316
        $region46: #{cross_attention.3} parent=43 // pred_check_branch
          %319 = sbr.rel (%p317) target = $region48
        $region47: #{cross_attention.3} parent=43 // pred_region
          %v320 = vld [vmem:[%s304] sm:$0xff]
          %v321 = vpack.c.bf16 %v320, %v320
          %v322 = vld [vmem:[%s2] sm:$0xf]
          %v323 = vld [vmem:[%s2 + $0x4] sm:$0xf]
          %v324 = vld [vmem:[%s2 + $0x8] sm:$0xf]
          %v325 = vld [vmem:[%s2 + $0xc] sm:$0xf]
          %v326 = vld [vmem:[%s3] sm:$0x1]
          %v328 = vlaneseq
          %v329 = vshrl.u32 %v328, 7
          %v330 = vsub.s32 0, %v329
          %v331 = vrot.slane %v326, %v330
          %v337 = vunpack.c.l.b16 %v322
          %v338 = vunpack.c.l.b16 %v323
          %v339 = vunpack.c.l.b16 %v324
          %v340 = vunpack.c.l.b16 %v325
          %v341 = vpack.c.b16 %v338, %v337
          %v342 = vpack.c.b16 %v340, %v339
          %vm345 = vcmask 261120
          %v347 = vsel %vm345, %v321, 0
          %349 = vmatprep.subr.bf16.mxu0 0
          %350 = vmatpush1.bf16.msra.mxu0 %v341
          %351 = vmatprep.subr.bf16.mxu0 0
          %352 = vmatpush1.bf16.msra.mxu0 %v342
          %353 = vmatprep.subr.bf16.mxu0 0
          %354 = vmatpush1.bf16.msra.mxu0 0
          %355 = vmatprep.subr.bf16.mxu0 0
          %356 = vmatpush1.bf16.msra.mxu0 0
          %357 = vmatprep.subr.bf16.mxu0 0
          %358 = vmatpush1.bf16.msra.mxu0 0
          %359 = vmatprep.subr.bf16.mxu0 0
          %360 = vmatpush1.bf16.msra.mxu0 0
          %361 = vmatprep.subr.bf16.mxu0 0
          %362 = vmatpush1.bf16.msra.mxu0 0
          %363 = vmatprep.subr.bf16.mxu0 0
          %364 = vmatpush1.bf16.msra.mxu0 0
          %365 = vmatprep.subr.bf16.mxu0 0
          %366 = vmatpush1.bf16.msra.mxu0 0
          %367 = vmatprep.subr.bf16.mxu0 0
          %368 = vmatpush1.bf16.msra.mxu0 0
          %369 = vmatprep.subr.bf16.mxu0 0
          %370 = vmatpush1.bf16.msra.mxu0 0
          %371 = vmatprep.subr.bf16.mxu0 0
          %372 = vmatpush1.bf16.msra.mxu0 0
          %373 = vmatprep.subr.bf16.mxu0 0
          %374 = vmatpush1.bf16.msra.mxu0 0
          %375 = vmatprep.subr.bf16.mxu0 0
          %376 = vmatpush1.bf16.msra.mxu0 0
          %377 = vmatprep.subr.bf16.mxu0 0
          %378 = vmatpush1.bf16.msra.mxu0 0
          %379 = vmatprep.subr.bf16.mxu0 0
          %380 = vmatpush1.bf16.msra.mxu0 0
          %381 = vmatprep.mubr.bf16.mxu0 0
          %382 = vmatmul.mubr.bf16.gmra.mrb[0].mxu0 %v347
          %v383 = vpop.f32.mrb[0].mxu0
          %v384 = vadd.f32 %v331, %v383
          %v385 = vpop.f32.mrb[0].mxu0
          %v386 = vpop.f32.mrb[0].mxu0
          %v387 = vpop.f32.mrb[0].mxu0
          %388 = vdwg.mxu0
          %v389 = vpack.c.bf16 %v384, %v384
          %vm390 = vcmask 257024
          %391 = vst.msk [vmem:[#allocation2] sm:$0xf] %vm390, %v389
          %vm392 = vcmask 7168
          %393 = vst.msk [vmem:[#allocation3] sm:$0xff] %vm392, -inf
          %394 = vst.msk [vmem:[#allocation3 + $0x8] sm:$0xff] %vm392, -inf
          %395 = vst.msk [vmem:[#allocation3 + $0x10] sm:$0xff] %vm392, -inf
          %396 = vst.msk [vmem:[#allocation3 + $0x18] sm:$0xff] %vm392, -inf
          %397 = vst.msk [vmem:[#allocation4] sm:$0xff] %vm392, 0.0
          %398 = vst.msk [vmem:[#allocation4 + $0x8] sm:$0xff] %vm392, 0.0
          %399 = vst.msk [vmem:[#allocation4 + $0x10] sm:$0xff] %vm392, 0.0
          %400 = vst.msk [vmem:[#allocation4 + $0x18] sm:$0xff] %vm392, 0.0
          %401 = vst.msk [vmem:[#allocation5] sm:$0xff] %vm345, 0.0
        $region48: #{cross_attention.3} parent=43 // pred_fallthru
          _
        %v402 = vld [vmem:[%s313] sm:$0xf]
        %v403 = vld [vmem:[%s313 + $0x4] sm:$0xf]
        %v404 = vld [vmem:[#allocation2] sm:$0xf]
        %v407 = vunpack.c.l.b16 %v402
        %v408 = vunpack.c.l.b16 %v403
        %v409 = vpack.c.b16 %v408, %v407
        %vm410 = vcmask 64512
        %v412 = vsel %vm410, %v404, 0
        %v415 = vsel %vm410, %v409, 0
        %417 = vmatprep.subr.bf16.mxu0 0
        %418 = vmatpush1.bf16.xpose.msra.mxu0 %v415
        %419 = vmatprep.subr.bf16.mxu0 0
        %420 = vmatpush1.bf16.xpose.msra.mxu0 0
        %421 = vmatprep.subr.bf16.mxu0 0
        %422 = vmatpush1.bf16.xpose.msra.mxu0 0
        %423 = vmatprep.subr.bf16.mxu0 0
        %424 = vmatpush1.bf16.xpose.msra.mxu0 0
        %425 = vmatprep.subr.bf16.mxu0 0
        %426 = vmatpush1.bf16.xpose.msra.mxu0 0
        %427 = vmatprep.subr.bf16.mxu0 0
        %428 = vmatpush1.bf16.xpose.msra.mxu0 0
        %429 = vmatprep.subr.bf16.mxu0 0
        %430 = vmatpush1.bf16.xpose.msra.mxu0 0
        %431 = vmatprep.subr.bf16.mxu0 0
        %432 = vmatpush1.bf16.xpose.msra.mxu0 0
        %433 = vmatprep.subr.bf16.mxu0 0
        %434 = vmatpush1.bf16.xpose.msra.mxu0 0
        %435 = vmatprep.subr.bf16.mxu0 0
        %436 = vmatpush1.bf16.xpose.msra.mxu0 0
        %437 = vmatprep.subr.bf16.mxu0 0
        %438 = vmatpush1.bf16.xpose.msra.mxu0 0
        %439 = vmatprep.subr.bf16.mxu0 0
        %440 = vmatpush1.bf16.xpose.msra.mxu0 0
        %441 = vmatprep.subr.bf16.mxu0 0
        %442 = vmatpush1.bf16.xpose.msra.mxu0 0
        %443 = vmatprep.subr.bf16.mxu0 0
        %444 = vmatpush1.bf16.xpose.msra.mxu0 0
        %445 = vmatprep.subr.bf16.mxu0 0
        %446 = vmatpush1.bf16.xpose.msra.mxu0 0
        %447 = vmatprep.subr.bf16.mxu0 0
        %448 = vmatpush1.bf16.xpose.msra.mxu0 0
        %449 = vmatprep.mubr.bf16.mxu0 0
        %450 = vmatmul.mubr.bf16.gmra.mrb[0].mxu0 %v412
        %v451 = vpop.f32.mrb[0].mxu0
        %v452 = vadd.f32 0.0, %v451
        %v453 = vpop.f32.mrb[0].mxu0
        %v454 = vpop.f32.mrb[0].mxu0
        %v455 = vpop.f32.mrb[0].mxu0
        %456 = vdwg.mxu0
        %v457 = vld [vmem:[#allocation3] sm:$0xff]
        %vm458 = vcmask 130048
        %v459 = vsel %vm458, %v452, -inf
        %460 = vmax.xlane.f32.xlu0 %v459
        %v461 = vpop.xlane.xlu0 %460
        %v462 = vmax.f32 %v457, %v461
        %v463 = vsub.f32 %v457, %v462
        %v464 = vmul.f32 %v463, 1.442695
        %v465 = vpow.pop %v464
        %467 = vset.pattern.permute.xlu0 0
        %468 = vperm.xlu0 %467, %v462
        %v469 = vpop.permute.xlu0 %468
        %v471 = vsub.f32 %v452, %v469
        %v472 = vmul.f32 %v471, 1.442695
        %v473 = vpow.pop %v472
        %v474 = vld [vmem:[#allocation4] sm:$0xff]
        %v475 = vmul.f32 %v465, %v474
        %v476 = vsel %vm458, %v473, 0.0
        %477 = vadd.xlane.f32.xlu0 %v476
        %v478 = vpop.xlane.xlu0 %477
        %v479 = vadd.f32 %v475, %v478
        %vm480 = vcmask 7168
        %481 = vst.msk [vmem:[#allocation4] sm:$0xff] %vm480, %v479
        %v482 = vld [vmem:[#allocation5] sm:$0xff]
        %484 = vset.pattern.permute.xlu0 0
        %485 = vperm.xlu0 %484, %v465
        %v486 = vpop.permute.xlu0 %485
        %v488 = vmul.f32 %v486, %v482
        %v489 = vpack.c.bf16 %v473, %v473
        %490 = vrot.lane.b32.xlu0 %v409, 96
        %v491 = vpop.permute.xlu0 %490
        %v494 = vsel %vm458, %v489, 0
        %496 = vmatprep.subr.bf16.mxu0 0
        %497 = vmatpush1.bf16.msra.mxu0 %v491
        %498 = vmatprep.subr.bf16.mxu0 0
        %499 = vmatpush1.bf16.msra.mxu0 0
        %500 = vmatprep.subr.bf16.mxu0 0
        %501 = vmatpush1.bf16.msra.mxu0 0
        %502 = vmatprep.subr.bf16.mxu0 0
        %503 = vmatpush1.bf16.msra.mxu0 0
        %504 = vmatprep.subr.bf16.mxu0 0
        %505 = vmatpush1.bf16.msra.mxu0 0
        %506 = vmatprep.subr.bf16.mxu0 0
        %507 = vmatpush1.bf16.msra.mxu0 0
        %508 = vmatprep.subr.bf16.mxu0 0
        %509 = vmatpush1.bf16.msra.mxu0 0
        %510 = vmatprep.subr.bf16.mxu0 0
        %511 = vmatpush1.bf16.msra.mxu0 0
        %512 = vmatprep.subr.bf16.mxu0 0
        %513 = vmatpush1.bf16.msra.mxu0 0
        %514 = vmatprep.subr.bf16.mxu0 0
        %515 = vmatpush1.bf16.msra.mxu0 0
        %516 = vmatprep.subr.bf16.mxu0 0
        %517 = vmatpush1.bf16.msra.mxu0 0
        %518 = vmatprep.subr.bf16.mxu0 0
        %519 = vmatpush1.bf16.msra.mxu0 0
        %520 = vmatprep.subr.bf16.mxu0 0
        %521 = vmatpush1.bf16.msra.mxu0 0
        %522 = vmatprep.subr.bf16.mxu0 0
        %523 = vmatpush1.bf16.msra.mxu0 0
        %524 = vmatprep.subr.bf16.mxu0 0
        %525 = vmatpush1.bf16.msra.mxu0 0
        %526 = vmatprep.subr.bf16.mxu0 0
        %527 = vmatpush1.bf16.msra.mxu0 0
        %528 = vmatprep.mubr.bf16.mxu0 0
        %529 = vmatmul.mubr.bf16.gmra.mrb[0].mxu0 %v494
        %v530 = vpop.f32.mrb[0].mxu0
        %v531 = vadd.f32 0.0, %v530
        %v532 = vpop.f32.mrb[0].mxu0
        %v533 = vpop.f32.mrb[0].mxu0
        %v534 = vpop.f32.mrb[0].mxu0
        %535 = vdwg.mxu0
        %v536 = vadd.f32 %v488, %v531
        %537 = vst.msk [vmem:[#allocation5] sm:$0xff] %vm410, %v536
        %538 = vst.msk [vmem:[#allocation3] sm:$0xff] %vm480, %v462
        %v539 = vld [vmem:[#allocation2] sm:$0xf]
        %v541 = vunpack.c.l.b16 %v539
        %v542 = vpack.c.b16 %v541, %v541
        %543 = vrot.lane.b32.xlu0 %v542, 120
        %v544 = vpop.permute.xlu0 %543
        %545 = vrot.lane.b32.xlu0 %v409, 120
        %v546 = vpop.permute.xlu0 %545
        %v548 = vsel %vm410, %v544, 0
        %v551 = vsel %vm410, %v546, 0
        %553 = vmatprep.subr.bf16.mxu0 0
        %554 = vmatpush1.bf16.xpose.msra.mxu0 %v551
        %555 = vmatprep.subr.bf16.mxu0 0
        %556 = vmatpush1.bf16.xpose.msra.mxu0 0
        %557 = vmatprep.subr.bf16.mxu0 0
        %558 = vmatpush1.bf16.xpose.msra.mxu0 0
        %559 = vmatprep.subr.bf16.mxu0 0
        %560 = vmatpush1.bf16.xpose.msra.mxu0 0
        %561 = vmatprep.subr.bf16.mxu0 0
        %562 = vmatpush1.bf16.xpose.msra.mxu0 0
        %563 = vmatprep.subr.bf16.mxu0 0
        %564 = vmatpush1.bf16.xpose.msra.mxu0 0
        %565 = vmatprep.subr.bf16.mxu0 0
        %566 = vmatpush1.bf16.xpose.msra.mxu0 0
        %567 = vmatprep.subr.bf16.mxu0 0
        %568 = vmatpush1.bf16.xpose.msra.mxu0 0
        %569 = vmatprep.subr.bf16.mxu0 0
        %570 = vmatpush1.bf16.xpose.msra.mxu0 0
        %571 = vmatprep.subr.bf16.mxu0 0
        %572 = vmatpush1.bf16.xpose.msra.mxu0 0
        %573 = vmatprep.subr.bf16.mxu0 0
        %574 = vmatpush1.bf16.xpose.msra.mxu0 0
        %575 = vmatprep.subr.bf16.mxu0 0
        %576 = vmatpush1.bf16.xpose.msra.mxu0 0
        %577 = vmatprep.subr.bf16.mxu0 0
        %578 = vmatpush1.bf16.xpose.msra.mxu0 0
        %579 = vmatprep.subr.bf16.mxu0 0
        %580 = vmatpush1.bf16.xpose.msra.mxu0 0
        %581 = vmatprep.subr.bf16.mxu0 0
        %582 = vmatpush1.bf16.xpose.msra.mxu0 0
        %583 = vmatprep.subr.bf16.mxu0 0
        %584 = vmatpush1.bf16.xpose.msra.mxu0 0
        %585 = vmatprep.mubr.bf16.mxu0 0
        %586 = vmatmul.mubr.bf16.gmra.mrb[0].mxu0 %v548
        %v587 = vpop.f32.mrb[0].mxu0
        %v588 = vadd.f32 0.0, %v587
        %v589 = vpop.f32.mrb[0].mxu0
        %v590 = vpop.f32.mrb[0].mxu0
        %v591 = vpop.f32.mrb[0].mxu0
        %592 = vdwg.mxu0
        %s593 = scalar_lea.vmem [#allocation3], 8
        %v594 = vld [vmem:[%s593] sm:$0xff]
        %v595 = vsel %vm458, %v588, -inf
        %596 = vmax.xlane.f32.xlu0 %v595
        %v597 = vpop.xlane.xlu0 %596
        %v598 = vmax.f32 %v594, %v597
        %v599 = vsub.f32 %v594, %v598
        %v600 = vmul.f32 %v599, 1.442695
        %v601 = vpow.pop %v600
        %603 = vset.pattern.permute.xlu0 0
        %604 = vperm.xlu0 %603, %v598
        %v605 = vpop.permute.xlu0 %604
        %v607 = vsub.f32 %v588, %v605
        %v608 = vmul.f32 %v607, 1.442695
        %v609 = vpow.pop %v608
        %s610 = scalar_lea.vmem [#allocation4], 8
        %v611 = vld [vmem:[%s610] sm:$0xff]
        %v612 = vmul.f32 %v601, %v611
        %v613 = vsel %vm458, %v609, 0.0
        %614 = vadd.xlane.f32.xlu0 %v613
        %v615 = vpop.xlane.xlu0 %614
        %v616 = vadd.f32 %v612, %v615
        %617 = vst.msk [vmem:[%s610] sm:$0xff] %vm480, %v616
        %v618 = vld [vmem:[#allocation5] sm:$0xff]
        %620 = vset.pattern.permute.xlu0 0
        %621 = vperm.xlu0 %620, %v601
        %v622 = vpop.permute.xlu0 %621
        %v624 = vmul.f32 %v622, %v618
        %v625 = vpack.c.bf16 %v609, %v609
        %626 = vrot.lane.b32.xlu0 %v409, 88
        %v627 = vpop.permute.xlu0 %626
        %v630 = vsel %vm458, %v625, 0
        %632 = vmatprep.subr.bf16.mxu0 0
        %633 = vmatpush1.bf16.msra.mxu0 %v627
        %634 = vmatprep.subr.bf16.mxu0 0
        %635 = vmatpush1.bf16.msra.mxu0 0
        %636 = vmatprep.subr.bf16.mxu0 0
        %637 = vmatpush1.bf16.msra.mxu0 0
        %638 = vmatprep.subr.bf16.mxu0 0
        %639 = vmatpush1.bf16.msra.mxu0 0
        %640 = vmatprep.subr.bf16.mxu0 0
        %641 = vmatpush1.bf16.msra.mxu0 0
        %642 = vmatprep.subr.bf16.mxu0 0
        %643 = vmatpush1.bf16.msra.mxu0 0
        %644 = vmatprep.subr.bf16.mxu0 0
        %645 = vmatpush1.bf16.msra.mxu0 0
        %646 = vmatprep.subr.bf16.mxu0 0
        %647 = vmatpush1.bf16.msra.mxu0 0
        %648 = vmatprep.subr.bf16.mxu0 0
        %649 = vmatpush1.bf16.msra.mxu0 0
        %650 = vmatprep.subr.bf16.mxu0 0
        %651 = vmatpush1.bf16.msra.mxu0 0
        %652 = vmatprep.subr.bf16.mxu0 0
        %653 = vmatpush1.bf16.msra.mxu0 0
        %654 = vmatprep.subr.bf16.mxu0 0
        %655 = vmatpush1.bf16.msra.mxu0 0
        %656 = vmatprep.subr.bf16.mxu0 0
        %657 = vmatpush1.bf16.msra.mxu0 0
        %658 = vmatprep.subr.bf16.mxu0 0
        %659 = vmatpush1.bf16.msra.mxu0 0
        %660 = vmatprep.subr.bf16.mxu0 0
        %661 = vmatpush1.bf16.msra.mxu0 0
        %662 = vmatprep.subr.bf16.mxu0 0
        %663 = vmatpush1.bf16.msra.mxu0 0
        %664 = vmatprep.mubr.bf16.mxu0 0
        %665 = vmatmul.mubr.bf16.gmra.mrb[0].mxu0 %v630
        %v666 = vpop.f32.mrb[0].mxu0
        %v667 = vadd.f32 0.0, %v666
        %v668 = vpop.f32.mrb[0].mxu0
        %v669 = vpop.f32.mrb[0].mxu0
        %v670 = vpop.f32.mrb[0].mxu0
        %671 = vdwg.mxu0
        %673 = vrot.lane.b32.xlu0 %v667, 8
        %v674 = vpop.permute.xlu0 %673
        %v676 = vadd.f32 %v624, %v674
        %vm677 = vcmask 130112
        %678 = vst.msk [vmem:[#allocation5] sm:$0xff] %vm677, %v676
        %679 = vst.msk [vmem:[%s593] sm:$0xff] %vm480, %v598
        %v680 = vld [vmem:[#allocation2] sm:$0xf]
        %v682 = vunpack.c.l.b16 %v680
        %v683 = vpack.c.b16 %v682, %v682
        %684 = vrot.lane.b32.xlu0 %v683, 112
        %v685 = vpop.permute.xlu0 %684
        %686 = vrot.lane.b32.xlu0 %v409, 112
        %v687 = vpop.permute.xlu0 %686
        %v689 = vsel %vm410, %v685, 0
        %v692 = vsel %vm410, %v687, 0
        %694 = vmatprep.subr.bf16.mxu0 0
        %695 = vmatpush1.bf16.xpose.msra.mxu0 %v692
        %696 = vmatprep.subr.bf16.mxu0 0
        %697 = vmatpush1.bf16.xpose.msra.mxu0 0
        %698 = vmatprep.subr.bf16.mxu0 0
        %699 = vmatpush1.bf16.xpose.msra.mxu0 0
        %700 = vmatprep.subr.bf16.mxu0 0
        %701 = vmatpush1.bf16.xpose.msra.mxu0 0
        %702 = vmatprep.subr.bf16.mxu0 0
        %703 = vmatpush1.bf16.xpose.msra.mxu0 0
        %704 = vmatprep.subr.bf16.mxu0 0
        %705 = vmatpush1.bf16.xpose.msra.mxu0 0
        %706 = vmatprep.subr.bf16.mxu0 0
        %707 = vmatpush1.bf16.xpose.msra.mxu0 0
        %708 = vmatprep.subr.bf16.mxu0 0
        %709 = vmatpush1.bf16.xpose.msra.mxu0 0
        %710 = vmatprep.subr.bf16.mxu0 0
        %711 = vmatpush1.bf16.xpose.msra.mxu0 0
        %712 = vmatprep.subr.bf16.mxu0 0
        %713 = vmatpush1.bf16.xpose.msra.mxu0 0
        %714 = vmatprep.subr.bf16.mxu0 0
        %715 = vmatpush1.bf16.xpose.msra.mxu0 0
        %716 = vmatprep.subr.bf16.mxu0 0
        %717 = vmatpush1.bf16.xpose.msra.mxu0 0
        %718 = vmatprep.subr.bf16.mxu0 0
        %719 = vmatpush1.bf16.xpose.msra.mxu0 0
        %720 = vmatprep.subr.bf16.mxu0 0
        %721 = vmatpush1.bf16.xpose.msra.mxu0 0
        %722 = vmatprep.subr.bf16.mxu0 0
        %723 = vmatpush1.bf16.xpose.msra.mxu0 0
        %724 = vmatprep.subr.bf16.mxu0 0
        %725 = vmatpush1.bf16.xpose.msra.mxu0 0
        %726 = vmatprep.mubr.bf16.mxu0 0
        %727 = vmatmul.mubr.bf16.gmra.mrb[0].mxu0 %v689
        %v728 = vpop.f32.mrb[0].mxu0
        %v729 = vadd.f32 0.0, %v728
        %v730 = vpop.f32.mrb[0].mxu0
        %v731 = vpop.f32.mrb[0].mxu0
        %v732 = vpop.f32.mrb[0].mxu0
        %733 = vdwg.mxu0
        %s734 = scalar_lea.vmem [#allocation3], 16
        %v735 = vld [vmem:[%s734] sm:$0xff]
        %v736 = vsel %vm458, %v729, -inf
        %737 = vmax.xlane.f32.xlu0 %v736
        %v738 = vpop.xlane.xlu0 %737
        %v739 = vmax.f32 %v735, %v738
        %v740 = vsub.f32 %v735, %v739
        %v741 = vmul.f32 %v740, 1.442695
        %v742 = vpow.pop %v741
        %744 = vset.pattern.permute.xlu0 0
        %745 = vperm.xlu0 %744, %v739
        %v746 = vpop.permute.xlu0 %745
        %v748 = vsub.f32 %v729, %v746
        %v749 = vmul.f32 %v748, 1.442695
        %v750 = vpow.pop %v749
        %s751 = scalar_lea.vmem [#allocation4], 16
        %v752 = vld [vmem:[%s751] sm:$0xff]
        %v753 = vmul.f32 %v742, %v752
        %v754 = vsel %vm458, %v750, 0.0
        %755 = vadd.xlane.f32.xlu0 %v754
        %v756 = vpop.xlane.xlu0 %755
        %v757 = vadd.f32 %v753, %v756
        %758 = vst.msk [vmem:[%s751] sm:$0xff] %vm480, %v757
        %v759 = vld [vmem:[#allocation5] sm:$0xff]
        %761 = vset.pattern.permute.xlu0 0
        %762 = vperm.xlu0 %761, %v742
        %v763 = vpop.permute.xlu0 %762
        %v765 = vmul.f32 %v763, %v759
        %v766 = vpack.c.bf16 %v750, %v750
        %767 = vrot.lane.b32.xlu0 %v409, 80
        %v768 = vpop.permute.xlu0 %767
        %v771 = vsel %vm458, %v766, 0
        %773 = vmatprep.subr.bf16.mxu0 0
        %774 = vmatpush1.bf16.msra.mxu0 %v768
        %775 = vmatprep.subr.bf16.mxu0 0
        %776 = vmatpush1.bf16.msra.mxu0 0
        %777 = vmatprep.subr.bf16.mxu0 0
        %778 = vmatpush1.bf16.msra.mxu0 0
        %779 = vmatprep.subr.bf16.mxu0 0
        %780 = vmatpush1.bf16.msra.mxu0 0
        %781 = vmatprep.subr.bf16.mxu0 0
        %782 = vmatpush1.bf16.msra.mxu0 0
        %783 = vmatprep.subr.bf16.mxu0 0
        %784 = vmatpush1.bf16.msra.mxu0 0
        %785 = vmatprep.subr.bf16.mxu0 0
        %786 = vmatpush1.bf16.msra.mxu0 0
        %787 = vmatprep.subr.bf16.mxu0 0
        %788 = vmatpush1.bf16.msra.mxu0 0
        %789 = vmatprep.subr.bf16.mxu0 0
        %790 = vmatpush1.bf16.msra.mxu0 0
        %791 = vmatprep.subr.bf16.mxu0 0
        %792 = vmatpush1.bf16.msra.mxu0 0
        %793 = vmatprep.subr.bf16.mxu0 0
        %794 = vmatpush1.bf16.msra.mxu0 0
        %795 = vmatprep.subr.bf16.mxu0 0
        %796 = vmatpush1.bf16.msra.mxu0 0
        %797 = vmatprep.subr.bf16.mxu0 0
        %798 = vmatpush1.bf16.msra.mxu0 0
        %799 = vmatprep.subr.bf16.mxu0 0
        %800 = vmatpush1.bf16.msra.mxu0 0
        %801 = vmatprep.subr.bf16.mxu0 0
        %802 = vmatpush1.bf16.msra.mxu0 0
        %803 = vmatprep.subr.bf16.mxu0 0
        %804 = vmatpush1.bf16.msra.mxu0 0
        %805 = vmatprep.mubr.bf16.mxu0 0
        %806 = vmatmul.mubr.bf16.gmra.mrb[0].mxu0 %v771
        %v807 = vpop.f32.mrb[0].mxu0
        %v808 = vadd.f32 0.0, %v807
        %v809 = vpop.f32.mrb[0].mxu0
        %v810 = vpop.f32.mrb[0].mxu0
        %v811 = vpop.f32.mrb[0].mxu0
        %812 = vdwg.mxu0
        %814 = vrot.lane.b32.xlu0 %v808, 16
        %v815 = vpop.permute.xlu0 %814
        %v817 = vadd.f32 %v765, %v815
        %vm818 = vcmask 195712
        %819 = vst.msk [vmem:[#allocation5] sm:$0xff] %vm818, %v817
        %820 = vst.msk [vmem:[%s734] sm:$0xff] %vm480, %v739
        %v821 = vld [vmem:[#allocation2] sm:$0xf]
        %v823 = vunpack.c.l.b16 %v821
        %v824 = vpack.c.b16 %v823, %v823
        %825 = vrot.lane.b32.xlu0 %v824, 104
        %v826 = vpop.permute.xlu0 %825
        %827 = vrot.lane.b32.xlu0 %v409, 104
        %v828 = vpop.permute.xlu0 %827
        %v830 = vsel %vm410, %v826, 0
        %v833 = vsel %vm410, %v828, 0
        %835 = vmatprep.subr.bf16.mxu0 0
        %836 = vmatpush1.bf16.xpose.msra.mxu0 %v833
        %837 = vmatprep.subr.bf16.mxu0 0
        %838 = vmatpush1.bf16.xpose.msra.mxu0 0
        %839 = vmatprep.subr.bf16.mxu0 0
        %840 = vmatpush1.bf16.xpose.msra.mxu0 0
        %841 = vmatprep.subr.bf16.mxu0 0
        %842 = vmatpush1.bf16.xpose.msra.mxu0 0
        %843 = vmatprep.subr.bf16.mxu0 0
        %844 = vmatpush1.bf16.xpose.msra.mxu0 0
        %845 = vmatprep.subr.bf16.mxu0 0
        %846 = vmatpush1.bf16.xpose.msra.mxu0 0
        %847 = vmatprep.subr.bf16.mxu0 0
        %848 = vmatpush1.bf16.xpose.msra.mxu0 0
        %849 = vmatprep.subr.bf16.mxu0 0
        %850 = vmatpush1.bf16.xpose.msra.mxu0 0
        %851 = vmatprep.subr.bf16.mxu0 0
        %852 = vmatpush1.bf16.xpose.msra.mxu0 0
        %853 = vmatprep.subr.bf16.mxu0 0
        %854 = vmatpush1.bf16.xpose.msra.mxu0 0
        %855 = vmatprep.subr.bf16.mxu0 0
        %856 = vmatpush1.bf16.xpose.msra.mxu0 0
        %857 = vmatprep.subr.bf16.mxu0 0
        %858 = vmatpush1.bf16.xpose.msra.mxu0 0
        %859 = vmatprep.subr.bf16.mxu0 0
        %860 = vmatpush1.bf16.xpose.msra.mxu0 0
        %861 = vmatprep.subr.bf16.mxu0 0
        %862 = vmatpush1.bf16.xpose.msra.mxu0 0
        %863 = vmatprep.subr.bf16.mxu0 0
        %864 = vmatpush1.bf16.xpose.msra.mxu0 0
        %865 = vmatprep.subr.bf16.mxu0 0
        %866 = vmatpush1.bf16.xpose.msra.mxu0 0
        %867 = vmatprep.mubr.bf16.mxu0 0
        %868 = vmatmul.mubr.bf16.gmra.mrb[0].mxu0 %v830
        %v869 = vpop.f32.mrb[0].mxu0
        %v870 = vadd.f32 0.0, %v869
        %v871 = vpop.f32.mrb[0].mxu0
        %v872 = vpop.f32.mrb[0].mxu0
        %v873 = vpop.f32.mrb[0].mxu0
        %874 = vdwg.mxu0
        %s875 = scalar_lea.vmem [#allocation3], 24
        %v876 = vld [vmem:[%s875] sm:$0xff]
        %v877 = vsel %vm458, %v870, -inf
        %878 = vmax.xlane.f32.xlu0 %v877
        %v879 = vpop.xlane.xlu0 %878
        %v880 = vmax.f32 %v876, %v879
        %v881 = vsub.f32 %v876, %v880
        %v882 = vmul.f32 %v881, 1.442695
        %v883 = vpow.pop %v882
        %885 = vset.pattern.permute.xlu0 0
        %886 = vperm.xlu0 %885, %v880
        %v887 = vpop.permute.xlu0 %886
        %v889 = vsub.f32 %v870, %v887
        %v890 = vmul.f32 %v889, 1.442695
        %v891 = vpow.pop %v890
        %s892 = scalar_lea.vmem [#allocation4], 24
        %v893 = vld [vmem:[%s892] sm:$0xff]
        %v894 = vmul.f32 %v883, %v893
        %v895 = vsel %vm458, %v891, 0.0
        %896 = vadd.xlane.f32.xlu0 %v895
        %v897 = vpop.xlane.xlu0 %896
        %v898 = vadd.f32 %v894, %v897
        %899 = vst.msk [vmem:[%s892] sm:$0xff] %vm480, %v898
        %v900 = vld [vmem:[#allocation5] sm:$0xff]
        %902 = vset.pattern.permute.xlu0 0
        %903 = vperm.xlu0 %902, %v883
        %v904 = vpop.permute.xlu0 %903
        %v906 = vmul.f32 %v904, %v900
        %v907 = vpack.c.bf16 %v891, %v891
        %908 = vrot.lane.b32.xlu0 %v409, 72
        %v909 = vpop.permute.xlu0 %908
        %v912 = vsel %vm458, %v907, 0
        %914 = vmatprep.subr.bf16.mxu0 0
        %915 = vmatpush1.bf16.msra.mxu0 %v909
        %916 = vmatprep.subr.bf16.mxu0 0
        %917 = vmatpush1.bf16.msra.mxu0 0
        %918 = vmatprep.subr.bf16.mxu0 0
        %919 = vmatpush1.bf16.msra.mxu0 0
        %920 = vmatprep.subr.bf16.mxu0 0
        %921 = vmatpush1.bf16.msra.mxu0 0
        %922 = vmatprep.subr.bf16.mxu0 0
        %923 = vmatpush1.bf16.msra.mxu0 0
        %924 = vmatprep.subr.bf16.mxu0 0
        %925 = vmatpush1.bf16.msra.mxu0 0
        %926 = vmatprep.subr.bf16.mxu0 0
        %927 = vmatpush1.bf16.msra.mxu0 0
        %928 = vmatprep.subr.bf16.mxu0 0
        %929 = vmatpush1.bf16.msra.mxu0 0
        %930 = vmatprep.subr.bf16.mxu0 0
        %931 = vmatpush1.bf16.msra.mxu0 0
        %932 = vmatprep.subr.bf16.mxu0 0
        %933 = vmatpush1.bf16.msra.mxu0 0
        %934 = vmatprep.subr.bf16.mxu0 0
        %935 = vmatpush1.bf16.msra.mxu0 0
        %936 = vmatprep.subr.bf16.mxu0 0
        %937 = vmatpush1.bf16.msra.mxu0 0
        %938 = vmatprep.subr.bf16.mxu0 0
        %939 = vmatpush1.bf16.msra.mxu0 0
        %940 = vmatprep.subr.bf16.mxu0 0
        %941 = vmatpush1.bf16.msra.mxu0 0
        %942 = vmatprep.subr.bf16.mxu0 0
        %943 = vmatpush1.bf16.msra.mxu0 0
        %944 = vmatprep.subr.bf16.mxu0 0
        %945 = vmatpush1.bf16.msra.mxu0 0
        %946 = vmatprep.mubr.bf16.mxu0 0
        %947 = vmatmul.mubr.bf16.gmra.mrb[0].mxu0 %v912
        %v948 = vpop.f32.mrb[0].mxu0
        %v949 = vadd.f32 0.0, %v948
        %v950 = vpop.f32.mrb[0].mxu0
        %v951 = vpop.f32.mrb[0].mxu0
        %v952 = vpop.f32.mrb[0].mxu0
        %953 = vdwg.mxu0
        %955 = vrot.lane.b32.xlu0 %v949, 24
        %v956 = vpop.permute.xlu0 %955
        %v958 = vadd.f32 %v906, %v956
        %vm959 = vcmask 261312
        %960 = vst.msk [vmem:[#allocation5] sm:$0xff] %vm959, %v958
        %961 = vst.msk [vmem:[%s875] sm:$0xff] %vm480, %v880
        // Predicated region
        $region49: #{cross_attention.3} parent=43 // pred_check
          %p962 = pneg %p316
        $region50: #{cross_attention.3} parent=43 // pred_check_branch
          %964 = sbr.rel (%p962) target = $region52
        $region51: #{cross_attention.3} parent=43 // pred_region
          %v965 = vld [vmem:[#allocation4] sm:$0xff]
          %v966 = vrcp.pop %v965
          %v967 = vmul.f32 %v965, %v966
          %v968 = vsub.f32 2.0, %v967
          %v969 = vmul.f32 %v966, %v968
          %v970 = vld [vmem:[#allocation5] sm:$0xff]
          %972 = vset.pattern.permute.xlu0 0
          %973 = vperm.xlu0 %972, %v969
          %v974 = vpop.permute.xlu0 %973
          %v976 = vmul.f32 %v970, %v974
          %977 = vst.msk [vmem:[#allocation5] sm:$0xff] %vm410, %v976
          %v978 = vld [vmem:[%s610] sm:$0xff]
          %v979 = vrcp.pop %v978
          %v980 = vmul.f32 %v978, %v979
          %v981 = vsub.f32 2.0, %v980
          %v982 = vmul.f32 %v979, %v981
          %v983 = vld [vmem:[#allocation5] sm:$0xff]
          %985 = vset.pattern.permute.xlu0 0
          %986 = vperm.xlu0 %985, %v982
          %v987 = vpop.permute.xlu0 %986
          %v989 = vmul.f32 %v983, %v987
          %990 = vst.msk [vmem:[#allocation5] sm:$0xff] %vm677, %v989
          %v991 = vld [vmem:[%s751] sm:$0xff]
          %v992 = vrcp.pop %v991
          %v993 = vmul.f32 %v991, %v992
          %v994 = vsub.f32 2.0, %v993
          %v995 = vmul.f32 %v992, %v994
          %v996 = vld [vmem:[#allocation5] sm:$0xff]
          %998 = vset.pattern.permute.xlu0 0
          %999 = vperm.xlu0 %998, %v995
          %v1000 = vpop.permute.xlu0 %999
          %v1002 = vmul.f32 %v996, %v1000
          %1003 = vst.msk [vmem:[#allocation5] sm:$0xff] %vm818, %v1002
          %v1004 = vld [vmem:[%s892] sm:$0xff]
          %v1005 = vrcp.pop %v1004
          %v1006 = vmul.f32 %v1004, %v1005
          %v1007 = vsub.f32 2.0, %v1006
          %v1008 = vmul.f32 %v1005, %v1007
          %v1009 = vld [vmem:[#allocation5] sm:$0xff]
          %1011 = vset.pattern.permute.xlu0 0
          %1012 = vperm.xlu0 %1011, %v1008
          %v1013 = vpop.permute.xlu0 %1012
          %v1015 = vmul.f32 %v1009, %v1013
          %1016 = vst.msk [vmem:[#allocation5] sm:$0xff] %vm959, %v1015
          %v1017 = vld [vmem:[#allocation5] sm:$0xff]
          %v1018 = vpack.c.bf16 %v1017, %v1017
          %v1019 = vld [vmem:[%s4] sm:$0xf]
          %v1020 = vld [vmem:[%s4 + $0x4] sm:$0xf]
          %v1021 = vld [vmem:[%s4 + $0x8] sm:$0xf]
          %v1022 = vld [vmem:[%s4 + $0xc] sm:$0xf]
          %v1023 = vld [vmem:[%s5] sm:$0x1]
          %v1025 = vlaneseq
          %v1026 = vshrl.u32 %v1025, 7
          %v1027 = vsub.s32 0, %v1026
          %v1028 = vrot.slane %v1023, %v1027
          %v1034 = vunpack.c.l.b16 %v1019
          %v1035 = vunpack.c.l.b16 %v1020
          %v1036 = vunpack.c.l.b16 %v1021
          %v1037 = vunpack.c.l.b16 %v1022
          %v1038 = vpack.c.b16 %v1035, %v1034
          %v1039 = vpack.c.b16 %v1037, %v1036
          %vm1042 = vcmask 261120
          %v1044 = vsel %vm1042, %v1018, 0
          %1046 = vmatprep.subr.bf16.mxu0 0
          %1047 = vmatpush1.bf16.msra.mxu0 %v1038
          %1048 = vmatprep.subr.bf16.mxu0 0
          %1049 = vmatpush1.bf16.msra.mxu0 %v1039
          %1050 = vmatprep.subr.bf16.mxu0 0
          %1051 = vmatpush1.bf16.msra.mxu0 0
          %1052 = vmatprep.subr.bf16.mxu0 0
          %1053 = vmatpush1.bf16.msra.mxu0 0
          %1054 = vmatprep.subr.bf16.mxu0 0
          %1055 = vmatpush1.bf16.msra.mxu0 0
          %1056 = vmatprep.subr.bf16.mxu0 0
          %1057 = vmatpush1.bf16.msra.mxu0 0
          %1058 = vmatprep.subr.bf16.mxu0 0
          %1059 = vmatpush1.bf16.msra.mxu0 0
          %1060 = vmatprep.subr.bf16.mxu0 0
          %1061 = vmatpush1.bf16.msra.mxu0 0
          %1062 = vmatprep.subr.bf16.mxu0 0
          %1063 = vmatpush1.bf16.msra.mxu0 0
          %1064 = vmatprep.subr.bf16.mxu0 0
          %1065 = vmatpush1.bf16.msra.mxu0 0
          %1066 = vmatprep.subr.bf16.mxu0 0
          %1067 = vmatpush1.bf16.msra.mxu0 0
          %1068 = vmatprep.subr.bf16.mxu0 0
          %1069 = vmatpush1.bf16.msra.mxu0 0
          %1070 = vmatprep.subr.bf16.mxu0 0
          %1071 = vmatpush1.bf16.msra.mxu0 0
          %1072 = vmatprep.subr.bf16.mxu0 0
          %1073 = vmatpush1.bf16.msra.mxu0 0
          %1074 = vmatprep.subr.bf16.mxu0 0
          %1075 = vmatpush1.bf16.msra.mxu0 0
          %1076 = vmatprep.subr.bf16.mxu0 0
          %1077 = vmatpush1.bf16.msra.mxu0 0
          %1078 = vmatprep.mubr.bf16.mxu0 0
          %1079 = vmatmul.mubr.bf16.gmra.mrb[0].mxu0 %v1044
          %v1080 = vpop.f32.mrb[0].mxu0
          %v1081 = vadd.f32 %v1028, %v1080
          %v1082 = vpop.f32.mrb[0].mxu0
          %v1083 = vpop.f32.mrb[0].mxu0
          %v1084 = vpop.f32.mrb[0].mxu0
          %1085 = vdwg.mxu0
          %1086 = vst.msk [vmem:[%s297] sm:$0xff] %vm1042, %v1081
        $region52: #{cross_attention.3} parent=43 // pred_fallthru
          _
        %s1087 = sand.u32 %s189, 1
        %s1088 = scalar_lea.sflag [#allocation7], %s1087
        %s1089 = sand.u32 %s189, 1
        %s1090 = smul.addr %s1089, 8
        %s1091 = scalar_lea.vmem [#allocation6], %s1090
        // Predicated region
        $region53: #{cross_attention.3} parent=43 // pred_check
          %p1092 = pneg %p199
        $region54: #{cross_attention.3} parent=43 // pred_check_branch
          %1094 = sbr.rel (%p1092) target = $region56
        $region55: #{cross_attention.3} parent=43 // pred_region
          %s1096 = ssub.s32 128, 128
          %1097 = vsyncadd %s1088, %s1096
          %s1098 = sadd.s32 %s26, %s25
          %s1099 = smul.addr %s1098, 128
          %s1100 = scalar_lea.hbm %s6, %s1099
          %s1102 = sshll.u32 %s1091, 4
          %s1103 = int_to_ptr.vmem [resolvable:$true] %s1102
          %1105 = dma.vmem_to_hbm [thread:$0]  %s1103, 128, %s1100, %s1088
        $region56: #{cross_attention.3} parent=43 // pred_fallthru
          _
      $region44: #{cross_attention.3} parent=5 // pred_fallthru
        _
      %p1106 = scmp.le.s32.totalorder 2, %s15
      // Predicated region
      $region57: #{cross_attention.3} parent=5 // pred_check
        %p1107 = pneg %p1106
      $region58: #{cross_attention.3} parent=5 // pred_check_branch
        %1109 = sbr.rel (%p1107) target = $region60
      $region59: #{cross_attention.3} parent=5 // pred_region
        %s1110 = ssub.s32 %s15, 2
        // Predicated region
        $region61: #{cross_attention.3} parent=59 // pred_check
          %p1111 = pneg %p205
        $region62: #{cross_attention.3} parent=59 // pred_check_branch
          %1113 = sbr.rel (%p1111) target = $region64
        $region63: #{cross_attention.3} parent=59 // pred_region
          %s1114 = sand.u32 %s190, 1
          %s1115 = scalar_lea.sflag [#allocation7], %s1114
          %s1116 = sand.u32 %s190, 1
          %s1117 = smul.addr %s1116, 8
          %s1118 = scalar_lea.vmem [#allocation6], %s1117
          %1119 = dma.done %s1115, 128
        $region64: #{cross_attention.3} parent=59 // pred_fallthru
          _
      $region60: #{cross_attention.3} parent=5 // pred_fallthru
        _
    $region6: #{cross_attention.3} parent=1 // loop_footer
      %s19 = sadd.s32 1, %s15
    $region7: #{cross_attention.3} parent=1 // loop_footer_branch
      %14 = sbr.rel target = $region3
    $region8: #{cross_attention.3} parent=1 // loop_exit
      _
    %1120 = vsyncpa [#allocation7], 1
    %s1121 = scalar_lea.sflag [#allocation7], 1
    %1122 = vsyncpa %s1121, 1

</llo_original>
